<compile_context>
chip_gen: v7x
topology: tpu7x:2x2x1
jax: 0.10.0
libtpu: 0.0.40
codegen_flags: <defaults>
</compile_context>

<pallas_src>
import functools

import numpy as np
import jax
import jax.numpy as jnp
from jax import lax
from jax.experimental import pallas as pl
from jax.experimental.pallas import tpu as pltpu


# ---------------------------------------------------------------------------
# Pallas kernel
# ---------------------------------------------------------------------------
def _self_attention_kernel(x_ref, w_ref, b_ref, pos_ref, out_ref, *,
                           c_out, H, W, tb, pos_bias, score_dtype):
    """One grid step == `tb` batch elements, all channels.

    Layout: rows = channels, lanes = (batch-in-tile, h, w) -> every load/store is a
    single lane-dense access; all (batch, channel) attention heads are processed
    jointly (no unrolled per-channel work).
    """
    C = c_out
    BC = C * tb

    # 1) q/k/v projection for the whole tile: ONE MXU matmul + one bias add.
    #    (3C, C_in) @ (C_in, tb*H*W) -> (3C, tb*H*W), f32 accumulation.
    qkv = jnp.dot(w_ref[...], x_ref[...], preferred_element_type=jnp.float32)
    qkv = qkv + b_ref[...].astype(jnp.float32)              # (3C, 1) broadcast

    # 2) Regroup into per-(channel, batch) attention heads: (C*tb, H, W).
    #    One small relayout; the leading-dim slices / collapses below are free.
    qkv = qkv.reshape(3 * C, tb, H, W)
    q = qkv[0 * C:1 * C].reshape(BC, H, W)
    k = qkv[1 * C:2 * C].reshape(BC, H, W)
    v = qkv[2 * C:3 * C].reshape(BC, H, W)

    pos = pos_ref[...].astype(jnp.float32)                   # (C, H, W)
    pos_b = jnp.broadcast_to(pos[:, None], (C, tb, H, W)).reshape(BC, H, W)

    # 3) Attention scores for all BC heads in one batched MXU dispatch.
    #    pos_bias=False:  q@k^T + q@pos^T  ==  q@(k + pos)^T   (algebraic fusion).
    k_eff = k if pos_bias else k + pos_b
    scores = lax.dot_general(
        q.astype(score_dtype), k_eff.astype(score_dtype),
        dimension_numbers=(((2,), (2,)), ((0,), (0,))),
        preferred_element_type=jnp.float32)                  # (BC, H, H)
    if pos_bias:
        scores = scores + pos_b                               # valid because H == W

    # 4) Softmax over the flattened H*H map, vectorised across ALL heads:
    #    one max / exp / sum / normalise pass over a lane-dense (BC, H*H) slab.
    att = scores.reshape(BC, H * H)
    m = jnp.max(att, axis=1, keepdims=True)
    e = jnp.exp(att - m)
    s = jnp.sum(e, axis=1, keepdims=True)
    p = e * pl.reciprocal(s, approx=False)                    # exact reciprocal

    # 5) Elementwise gate by v (valid because H == W), then ONE lane-dense store of
    #    the whole (c_out, tb*H*W) block.
    gated = p * v.reshape(BC, H * W)                          # (BC, H*W)
    out_ref[...] = gated.reshape(C, tb * H * W).astype(out_ref.dtype)


# ---------------------------------------------------------------------------
# Tiling helpers
# ---------------------------------------------------------------------------
def _pick_batch_tile(B, c_in, c_out, H, W, in_itemsize, out_itemsize,
                     budget_bytes=40 << 20, min_grid_steps=2):
    """Pick the batch tile (a divisor of B) for the 1-D grid over batch tiles.

    The VMEM model counts the double-buffered x/out tiles, the single-buffered
    resident constants and the f32 in-kernel intermediates (qkv, q/k/v/k_eff/pos,
    scores + exp + probs, gated output).  The 40 MiB budget leaves headroom on every
    generation, including v7x's 64 MiB / TensorCore.
    """
    def step_bytes(tb):
        lanes = tb * H * W
        io = 2 * lanes * (c_in * in_itemsize + c_out * out_itemsize)      # dbl-buffered
        consts = (3 * c_out * c_in + c_out * H * W) * in_itemsize + 3 * c_out * 4
        inter = 8 * c_out * lanes * 4 + 3 * c_out * tb * H * H * 4        # f32 temps
        return io + consts + inter

    divisors = [t for t in range(1, B + 1) if B % t == 0]
    fitting = [t for t in divisors if step_bytes(t) <= budget_bytes] or [1]
    # Prefer lane-dense I/O tiles (>= 128 lanes -> unmasked vld/vst) ...
    lane_ok = [t for t in fitting if t * H * W >= 128] or fitting
    # ... and keep >= min_grid_steps grid steps so both of v7x's TensorCores get work
    # under dimension_semantics=("parallel",).  v5e/v6e lose at most ~0.35us/step.
    multi = [t for t in lane_ok if B // t >= min_grid_steps]
    pool = multi if multi else lane_ok
    tb = max(pool)
    return tb, step_bytes(tb)


def _build_specs(c_in, c_out, H, W, tb, buffered_constants):
    def const_spec(shape):
        index_map = lambda i: (0,) * len(shape)
        if buffered_constants:
            # Grid-constant blocks: no double buffering needed.
            return pl.BlockSpec(shape, index_map, pipeline_mode=pl.Buffered(1))
        return pl.BlockSpec(shape, index_map)

    in_specs = [
        pl.BlockSpec((c_in, tb * H * W), lambda i: (0, i)),   # x tile (lane-dense)
        const_spec((3 * c_out, c_in)),                        # W_qkv   (resident)
        const_spec((3 * c_out, 1)),                           # biases  (resident)
        const_spec((c_out, H, W)),                            # pos     (resident)
    ]
    out_specs = pl.BlockSpec((c_out, tb * H * W), lambda i: (0, i))
    return in_specs, out_specs


# ---------------------------------------------------------------------------
# Wrapper
# ---------------------------------------------------------------------------
def self_attention_forward(x, wq, wk, wv, bq, bk, bv, pos_code, *,
                           pos_bias=False, compute_dtype=None):
    B, c_in, H, W = x.shape
    c_out = wq.shape[0]
    assert H == W == pos_code.shape[-1], "fm_sz must equal both spatial dims"
    assert pos_code.shape == (c_out, H, W)
    if compute_dtype is None:
        compute_dtype = x.dtype
    compute_dtype = np.dtype(compute_dtype)

    # ---- layout plumbing (cheap XLA ops, outside the kernel) ----------------
    # x: (B, C_in, H, W) -> rows = c_in, lanes = (b, h, w)
    x_rows = jnp.transpose(x, (1, 0, 2, 3)).reshape(c_in, B * H * W)
    x_rows = x_rows.astype(compute_dtype)
    w_all = jnp.concatenate([wq, wk, wv], axis=0).astype(compute_dtype)   # (3C, C_in)
    b_col = jnp.concatenate([bq, bk, bv]).reshape(3 * c_out, 1).astype(jnp.float32)
    pos_rows = pos_code.astype(compute_dtype)                              # (C, H, W)

    tb, est_bytes = _pick_batch_tile(
        B, c_in, c_out, H, W,
        in_itemsize=compute_dtype.itemsize, out_itemsize=x.dtype.itemsize)
    vmem_limit = int(min(48 << 20, max(32 << 20, 2 * est_bytes)))

    kernel = functools.partial(
        _self_attention_kernel, c_out=c_out, H=H, W=W, tb=tb,
        pos_bias=pos_bias, score_dtype=compute_dtype)

    def call(buffered_constants):
        in_specs, out_specs = _build_specs(c_in, c_out, H, W, tb, buffered_constants)
        return pl.pallas_call(
            kernel,
            out_shape=jax.ShapeDtypeStruct((c_out, B * H * W), x.dtype),
            grid_spec=pltpu.PrefetchScalarGridSpec(
                num_scalar_prefetch=0,
                grid=(B // tb,),
                in_specs=in_specs,
                out_specs=out_specs),
            compiler_params=pltpu.CompilerParams(
                dimension_semantics=("parallel",),
                vmem_limit_bytes=vmem_limit),
        )(x_rows, w_all, b_col, pos_rows)

    if hasattr(pl, "Buffered"):
        try:
            out_rows = call(True)
        except Exception:
            # pipeline_mode=pl.Buffered(1) unsupported on this JAX version/backend;
            # fall back to default (double-buffered) constant blocks.
            out_rows = call(False)
    else:
        out_rows = call(False)

    # rows = c_out, lanes = (b, h, w)  ->  (B, C_out, H, W)
    return jnp.transpose(out_rows.reshape(c_out, B, H, W), (1, 0, 2, 3))


# ---------------------------------------------------------------------------
# Parameter / pos_code construction (deterministic, mirrors module __init__)
# ---------------------------------------------------------------------------
def get_pos_code(fm_sz, out_c):
    vals = []
    for i in range(fm_sz):
        fn = np.sin if i % 2 == 0 else np.cos
        vals.append(fn(1.0 / 10000 ** ((i // 2) / fm_sz)))
    row = np.array([vals])                                   # (1, fm_sz)
    mat = (row + row.T).astype(np.float32)                   # (fm_sz, fm_sz)
    return jnp.asarray(np.stack([mat] * out_c, axis=0))      # (out_c, fm_sz, fm_sz)


def init_params(key, in_c, out_c):
    ks = jax.random.split(key, 6)
    bound = 1.0 / np.sqrt(in_c)                              # Conv2d(k=1) default init
    wq = jax.random.uniform(ks[0], (out_c, in_c), jnp.float32, -bound, bound)
    wk = jax.random.uniform(ks[1], (out_c, in_c), jnp.float32, -bound, bound)
    wv = jax.random.uniform(ks[2], (out_c, in_c), jnp.float32, -bound, bound)
    bq = jax.random.uniform(ks[3], (out_c,), jnp.float32, -bound, bound)
    bk = jax.random.uniform(ks[4], (out_c,), jnp.float32, -bound, bound)
    bv = jax.random.uniform(ks[5], (out_c,), jnp.float32, -bound, bound)
    return wq, wk, wv, bq, bk, bv


# ---------------------------------------------------------------------------
# Pure-JAX reference (for correctness verification)
# ---------------------------------------------------------------------------
def reference_forward(x, wq, wk, wv, bq, bk, bv, pos_code, pos_bias=False):
    def conv(w, b):
        return jnp.einsum('oi,bihw->bohw', w, x) + b[None, :, None, None]
    q, k, v = conv(wq, bq), conv(wk, bk), conv(wv, bv)
    qk = jnp.einsum('bchw,bcjw->bchj', q, k)
    if pos_bias:
        att = qk + pos_code[None]
    else:
        att = qk + jnp.einsum('bchw,cjw->bchj', q, pos_code)
    B, C, H, H2 = att.shape
    att = jax.nn.softmax(att.reshape(B, C, H * H2), axis=2).reshape(B, C, H, H2)
    return att * v


if __name__ == "__main__":
    B, in_c, out_c, fm_sz = 2, 4, 4, 16

    key = jax.random.PRNGKey(0)
    kx, kp = jax.random.split(key)
    x = jax.random.normal(kx, (B, in_c, fm_sz, fm_sz), jnp.float32)
    wq, wk, wv, bq, bk, bv = init_params(kp, in_c, out_c)
    pos_code = get_pos_code(fm_sz, out_c)

    # --- f32 path: exact MXU accumulation + exact softmax reciprocal --------
    ref = reference_forward(x, wq, wk, wv, bq, bk, bv, pos_code, pos_bias=False)
    out = self_attention_forward(x, wq, wk, wv, bq, bk, bv, pos_code,
                                 pos_bias=False, compute_dtype=jnp.float32)
    out = jax.block_until_ready(out)
    assert out.shape == (B, out_c, fm_sz, fm_sz)
    err = float(jnp.max(jnp.abs(out - ref)))
    assert err < 1e-3, f"f32 mismatch vs reference: max abs err {err}"

    # --- pos_bias=True branch, also exact f32 --------------------------------
    ref_pb = reference_forward(x, wq, wk, wv, bq, bk, bv, pos_code, pos_bias=True)
    out_pb = self_attention_forward(x, wq, wk, wv, bq, bk, bv, pos_code,
                                    pos_bias=True, compute_dtype=jnp.float32)
    out_pb = jax.block_until_ready(out_pb)
    err_pb = float(jnp.max(jnp.abs(out_pb - ref_pb)))
    assert err_pb < 1e-3, f"pos_bias=True mismatch vs reference: max abs err {err_pb}"

    # --- bf16 operand path (MXU throughput / DMA-bytes optimisation) --------
    # bf16 operands with f32 accumulation; loose sanity bound only.
    out_bf16 = self_attention_forward(x, wq, wk, wv, bq, bk, bv, pos_code,
                                      pos_bias=False, compute_dtype=jnp.bfloat16)
    out_bf16 = jax.block_until_ready(out_bf16)
    assert out_bf16.shape == (B, out_c, fm_sz, fm_sz)
    assert bool(jnp.isfinite(out_bf16).all())
    err_bf16 = float(jnp.max(jnp.abs(out_bf16 - ref)))
    assert err_bf16 < 0.5, f"bf16 path grossly wrong: max abs err {err_bf16}"

    print("KERNEL_OK")
</pallas_src>

<mosaic_0001>
module attributes {stable_mosaic.version = 11 : i64} {
  func.func @_self_attention_kernel(%arg0: i32, %arg1: memref<4x256xf32, #tpu.memory_space<vmem>>, %arg2: memref<12x4xf32, #tpu.memory_space<vmem>>, %arg3: memref<12x1xf32, #tpu.memory_space<vmem>>, %arg4: memref<4x16x16xf32, #tpu.memory_space<vmem>>, %arg5: memref<4x256xf32, #tpu.memory_space<vmem>>) attributes {dimension_semantics = [#tpu.dimension_semantics<parallel>], iteration_bounds = array<i64: 2>, scalar_prefetch = 0 : i64, scratch_operands = 0 : i64, tpu.core_type = #tpu.core_type<tc>, window_params = [{transform_indices = @transform_0, window_bounds = array<i64: 4, 256>}, {pipeline_mode = #tpu.pipeline_mode<synchronous>, transform_indices = @transform_1, window_bounds = array<i64: 12, 4>}, {pipeline_mode = #tpu.pipeline_mode<synchronous>, transform_indices = @transform_2, window_bounds = array<i64: 12, 1>}, {pipeline_mode = #tpu.pipeline_mode<synchronous>, transform_indices = @transform_3, window_bounds = array<i64: 4, 16, 16>}, {transform_indices = @transform_4, window_bounds = array<i64: 4, 256>}]} {
    %c0 = arith.constant 0 : index
    %c0_0 = arith.constant 0 : index
    %0 = vector.load %arg2[%c0, %c0_0] : memref<12x4xf32, #tpu.memory_space<vmem>>, vector<12x4xf32>
    %c0_1 = arith.constant 0 : index
    %c0_2 = arith.constant 0 : index
    %1 = vector.load %arg1[%c0_1, %c0_2] : memref<4x256xf32, #tpu.memory_space<vmem>>, vector<4x256xf32>
    %cst = arith.constant dense<0.000000e+00> : vector<12x256xf32>
    %2 = tpu.matmul %0, %1, %cst {dimension_numbers = #tpu.dot_dimension_numbers<[1], [0], [0], [1], [0, 0, 1, 1], [], []>} : vector<12x4xf32>, vector<4x256xf32>, vector<12x256xf32> -> vector<12x256xf32>
    %c0_3 = arith.constant 0 : index
    %c0_4 = arith.constant 0 : index
    %3 = vector.load %arg3[%c0_3, %c0_4] : memref<12x1xf32, #tpu.memory_space<vmem>>, vector<12x1xf32>
    %4 = vector.broadcast %3 : vector<12x1xf32> to vector<12x256xf32>
    %5 = arith.addf %2, %4 : vector<12x256xf32>
    %6 = vector.shape_cast %5 : vector<12x256xf32> to vector<12x1x16x16xf32>
    %7 = vector.extract_strided_slice %6 {offsets = [0, 0, 0, 0], sizes = [4, 1, 16, 16], strides = [1, 1, 1, 1]} : vector<12x1x16x16xf32> to vector<4x1x16x16xf32>
    %8 = vector.shape_cast %7 : vector<4x1x16x16xf32> to vector<4x16x16xf32>
    %9 = vector.extract_strided_slice %6 {offsets = [4, 0, 0, 0], sizes = [4, 1, 16, 16], strides = [1, 1, 1, 1]} : vector<12x1x16x16xf32> to vector<4x1x16x16xf32>
    %10 = vector.shape_cast %9 : vector<4x1x16x16xf32> to vector<4x16x16xf32>
    %11 = vector.extract_strided_slice %6 {offsets = [8, 0, 0, 0], sizes = [4, 1, 16, 16], strides = [1, 1, 1, 1]} : vector<12x1x16x16xf32> to vector<4x1x16x16xf32>
    %12 = vector.shape_cast %11 : vector<4x1x16x16xf32> to vector<4x16x16xf32>
    %c0_5 = arith.constant 0 : index
    %c0_6 = arith.constant 0 : index
    %c0_7 = arith.constant 0 : index
    %13 = vector.load %arg4[%c0_5, %c0_6, %c0_7] : memref<4x16x16xf32, #tpu.memory_space<vmem>>, vector<4x16x16xf32>
    %14 = vector.shape_cast %13 : vector<4x16x16xf32> to vector<4x1x16x16xf32>
    %15 = vector.shape_cast %14 : vector<4x1x16x16xf32> to vector<4x16x16xf32>
    %16 = arith.addf %10, %15 : vector<4x16x16xf32>
    %cst_8 = arith.constant dense<0.000000e+00> : vector<4x16x16xf32>
    %17 = tpu.matmul %8, %16, %cst_8 {dimension_numbers = #tpu.dot_dimension_numbers<[2], [2], [1], [1], [0, 0, 0, 1, 1, 1], [0], [0]>} : vector<4x16x16xf32>, vector<4x16x16xf32>, vector<4x16x16xf32> -> vector<4x16x16xf32>
    %18 = vector.shape_cast %17 : vector<4x16x16xf32> to vector<4x256xf32>
    %cst_9 = arith.constant dense<0xFF800000> : vector<4xf32>
    %19 = vector.multi_reduction <maximumf>, %18, %cst_9 [1] : vector<4x256xf32> to vector<4xf32>
    %20 = vector.shape_cast %19 : vector<4xf32> to vector<4x1xf32>
    %21 = vector.broadcast %20 : vector<4x1xf32> to vector<4x256xf32>
    %22 = arith.subf %18, %21 : vector<4x256xf32>
    %23 = math.exp %22 : vector<4x256xf32>
    %cst_10 = arith.constant dense<0.000000e+00> : vector<4xf32>
    %24 = vector.multi_reduction <add>, %23, %cst_10 [1] : vector<4x256xf32> to vector<4xf32>
    %25 = vector.shape_cast %24 : vector<4xf32> to vector<4x1xf32>
    %26 = tpu.reciprocal %25 : vector<4x1xf32> -> vector<4x1xf32>
    %27 = vector.broadcast %26 : vector<4x1xf32> to vector<4x256xf32>
    %28 = arith.mulf %23, %27 : vector<4x256xf32>
    %29 = vector.shape_cast %12 : vector<4x16x16xf32> to vector<4x256xf32>
    %30 = arith.mulf %28, %29 : vector<4x256xf32>
    %c0_11 = arith.constant 0 : index
    %c0_12 = arith.constant 0 : index
    %31 = vector.load %arg5[%c0_11, %c0_12] : memref<4x256xf32, #tpu.memory_space<vmem>>, vector<4x256xf32>
    tpu.vector_store %arg5[%c0_11, %c0_12], %30 {strides = array<i32>} : memref<4x256xf32, #tpu.memory_space<vmem>>, vector<4x256xf32>,
    return
  }
  func.func @transform_0(%arg0: i32) -> (i32, i32) {
    %c0_i32 = arith.constant 0 : i32
    %c0_i32_0 = arith.constant 0 : i32
    return %c0_i32, %arg0 : i32, i32
  }
  func.func @transform_1(%arg0: i32) -> (i32, i32) {
    %c0_i32 = arith.constant 0 : i32
    %c0_i32_0 = arith.constant 0 : i32
    %c0_i32_1 = arith.constant 0 : i32
    return %c0_i32, %c0_i32_0 : i32, i32
  }
  func.func @transform_2(%arg0: i32) -> (i32, i32) {
    %c0_i32 = arith.constant 0 : i32
    %c0_i32_0 = arith.constant 0 : i32
    %c0_i32_1 = arith.constant 0 : i32
    return %c0_i32, %c0_i32_0 : i32, i32
  }
  func.func @transform_3(%arg0: i32) -> (i32, i32, i32) {
    %c0_i32 = arith.constant 0 : i32
    %c0_i32_0 = arith.constant 0 : i32
    %c0_i32_1 = arith.constant 0 : i32
    %c0_i32_2 = arith.constant 0 : i32
    return %c0_i32, %c0_i32_0, %c0_i32_1 : i32, i32, i32
  }
  func.func @transform_4(%arg0: i32) -> (i32, i32) {
    %c0_i32 = arith.constant 0 : i32
    %c0_i32_0 = arith.constant 0 : i32
    return %c0_i32, %arg0 : i32, i32
  }
}

module attributes {stable_mosaic.version = 11 : i64} {
  func.func @_self_attention_kernel(%arg0: i32, %arg1: memref<4x256xf32, #tpu.memory_space<vmem>>, %arg2: memref<12x4xf32, #tpu.memory_space<vmem>>, %arg3: memref<12x1xf32, #tpu.memory_space<vmem>>, %arg4: memref<4x16x16xf32, #tpu.memory_space<vmem>>, %arg5: memref<4x256xf32, #tpu.memory_space<vmem>>) attributes {dimension_semantics = [#tpu.dimension_semantics<parallel>], iteration_bounds = array<i64: 2>, scalar_prefetch = 0 : i64, scratch_operands = 0 : i64, tpu.core_type = #tpu.core_type<tc>, window_params = [{transform_indices = @transform_0, window_bounds = array<i64: 4, 256>}, {pipeline_mode = #tpu.pipeline_mode<synchronous>, transform_indices = @transform_1, window_bounds = array<i64: 12, 4>}, {pipeline_mode = #tpu.pipeline_mode<synchronous>, transform_indices = @transform_2, window_bounds = array<i64: 12, 1>}, {pipeline_mode = #tpu.pipeline_mode<synchronous>, transform_indices = @transform_3, window_bounds = array<i64: 4, 16, 16>}, {transform_indices = @transform_4, window_bounds = array<i64: 4, 256>}]} {
    %c0 = arith.constant 0 : index
    %c0_0 = arith.constant 0 : index
    %0 = vector.load %arg2[%c0, %c0_0] : memref<12x4xf32, #tpu.memory_space<vmem>>, vector<12x4xf32>
    %c0_1 = arith.constant 0 : index
    %c0_2 = arith.constant 0 : index
    %1 = vector.load %arg1[%c0_1, %c0_2] : memref<4x256xf32, #tpu.memory_space<vmem>>, vector<4x256xf32>
    %cst = arith.constant dense<0.000000e+00> : vector<12x256xf32>
    %2 = tpu.matmul %0, %1, %cst {dimension_numbers = #tpu.dot_dimension_numbers<[1], [0], [0], [1], [0, 0, 1, 1], [], []>} : vector<12x4xf32>, vector<4x256xf32>, vector<12x256xf32> -> vector<12x256xf32>
    %c0_3 = arith.constant 0 : index
    %c0_4 = arith.constant 0 : index
    %3 = vector.load %arg3[%c0_3, %c0_4] : memref<12x1xf32, #tpu.memory_space<vmem>>, vector<12x1xf32>
    %4 = vector.broadcast %3 : vector<12x1xf32> to vector<12x256xf32>
    %5 = arith.addf %2, %4 : vector<12x256xf32>
    %6 = vector.shape_cast %5 : vector<12x256xf32> to vector<12x1x16x16xf32>
    %7 = vector.extract_strided_slice %6 {offsets = [0, 0, 0, 0], sizes = [4, 1, 16, 16], strides = [1, 1, 1, 1]} : vector<12x1x16x16xf32> to vector<4x1x16x16xf32>
    %8 = vector.shape_cast %7 : vector<4x1x16x16xf32> to vector<4x16x16xf32>
    %9 = vector.extract_strided_slice %6 {offsets = [4, 0, 0, 0], sizes = [4, 1, 16, 16], strides = [1, 1, 1, 1]} : vector<12x1x16x16xf32> to vector<4x1x16x16xf32>
    %10 = vector.shape_cast %9 : vector<4x1x16x16xf32> to vector<4x16x16xf32>
    %11 = vector.extract_strided_slice %6 {offsets = [8, 0, 0, 0], sizes = [4, 1, 16, 16], strides = [1, 1, 1, 1]} : vector<12x1x16x16xf32> to vector<4x1x16x16xf32>
    %12 = vector.shape_cast %11 : vector<4x1x16x16xf32> to vector<4x16x16xf32>
    %c0_5 = arith.constant 0 : index
    %c0_6 = arith.constant 0 : index
    %c0_7 = arith.constant 0 : index
    %13 = vector.load %arg4[%c0_5, %c0_6, %c0_7] : memref<4x16x16xf32, #tpu.memory_space<vmem>>, vector<4x16x16xf32>
    %14 = vector.shape_cast %13 : vector<4x16x16xf32> to vector<4x1x16x16xf32>
    %15 = vector.shape_cast %14 : vector<4x1x16x16xf32> to vector<4x16x16xf32>
    %16 = arith.addf %10, %15 : vector<4x16x16xf32>
    %cst_8 = arith.constant dense<0.000000e+00> : vector<4x16x16xf32>
    %17 = tpu.matmul %8, %16, %cst_8 {dimension_numbers = #tpu.dot_dimension_numbers<[2], [2], [1], [1], [0, 0, 0, 1, 1, 1], [0], [0]>} : vector<4x16x16xf32>, vector<4x16x16xf32>, vector<4x16x16xf32> -> vector<4x16x16xf32>
    %18 = vector.shape_cast %17 : vector<4x16x16xf32> to vector<4x256xf32>
    %cst_9 = arith.constant dense<0xFF800000> : vector<4xf32>
    %19 = vector.multi_reduction <maximumf>, %18, %cst_9 [1] : vector<4x256xf32> to vector<4xf32>
    %20 = vector.shape_cast %19 : vector<4xf32> to vector<4x1xf32>
    %21 = vector.broadcast %20 : vector<4x1xf32> to vector<4x256xf32>
    %22 = arith.subf %18, %21 : vector<4x256xf32>
    %23 = math.exp %22 : vector<4x256xf32>
    %cst_10 = arith.constant dense<0.000000e+00> : vector<4xf32>
    %24 = vector.multi_reduction <add>, %23, %cst_10 [1] : vector<4x256xf32> to vector<4xf32>
    %25 = vector.shape_cast %24 : vector<4xf32> to vector<4x1xf32>
    %26 = tpu.reciprocal %25 : vector<4x1xf32> -> vector<4x1xf32>
    %27 = vector.broadcast %26 : vector<4x1xf32> to vector<4x256xf32>
    %28 = arith.mulf %23, %27 : vector<4x256xf32>
    %29 = vector.shape_cast %12 : vector<4x16x16xf32> to vector<4x256xf32>
    %30 = arith.mulf %28, %29 : vector<4x256xf32>
    %c0_11 = arith.constant 0 : index
    %c0_12 = arith.constant 0 : index
    %31 = vector.load %arg5[%c0_11, %c0_12] : memref<4x256xf32, #tpu.memory_space<vmem>>, vector<4x256xf32>
    tpu.vector_store %arg5[%c0_11, %c0_12], %30 {strides = array<i32>} : memref<4x256xf32, #tpu.memory_space<vmem>>, vector<4x256xf32>,
    return
  }
  func.func @transform_0(%arg0: i32) -> (i32, i32) {
    %c0_i32 = arith.constant 0 : i32
    %c0_i32_0 = arith.constant 0 : i32
    return %c0_i32, %arg0 : i32, i32
  }
  func.func @transform_1(%arg0: i32) -> (i32, i32) {
    %c0_i32 = arith.constant 0 : i32
    %c0_i32_0 = arith.constant 0 : i32
    %c0_i32_1 = arith.constant 0 : i32
    return %c0_i32, %c0_i32_0 : i32, i32
  }
  func.func @transform_2(%arg0: i32) -> (i32, i32) {
    %c0_i32 = arith.constant 0 : i32
    %c0_i32_0 = arith.constant 0 : i32
    %c0_i32_1 = arith.constant 0 : i32
    return %c0_i32, %c0_i32_0 : i32, i32
  }
  func.func @transform_3(%arg0: i32) -> (i32, i32, i32) {
    %c0_i32 = arith.constant 0 : i32
    %c0_i32_0 = arith.constant 0 : i32
    %c0_i32_1 = arith.constant 0 : i32
    %c0_i32_2 = arith.constant 0 : i32
    return %c0_i32, %c0_i32_0, %c0_i32_1 : i32, i32, i32
  }
  func.func @transform_4(%arg0: i32) -> (i32, i32) {
    %c0_i32 = arith.constant 0 : i32
    %c0_i32_0 = arith.constant 0 : i32
    return %c0_i32, %arg0 : i32, i32
  }
}

</mosaic_0001>

<llo_original>
// kernel: tpu_custom_call.1
$region0: #{tpu_custom_call.1}
  #allocation0 [shape = 'u32[]', space=smem, size = 0x4, offset = 0x4, fixed_abs, tag = 'smem constant byte address 0x4 - core index']
  #allocation1 [shape = 'u32[144,128]{1,0:T(1,128)}', space=vmem, size = 0x12000, scoped, tag = 'internal scratch']
  %s0 = inlined_call_operand.vmem [shape: f32[4,512], index: 0, kind: input, shape index: {}]
  %s1 = inlined_call_operand.vmem [shape: f32[12,4], index: 1, kind: input, shape index: {}]
  %s2 = inlined_call_operand.vmem [shape: f32[12,1], index: 2, kind: input, shape index: {}]
  %s3 = inlined_call_operand.hbm [shape: f32[4,16,16], index: 3, kind: input, shape index: {}]
  %s4 = inlined_call_operand.hbm [shape: f32[4,512], index: 4, kind: output, shape index: {}]
  %s5 = sld [smem:[#allocation0]]
  $region53: #{tpu_custom_call.1} parent=0
    _
  %s7 = ssub.s32 1, %s5
  %s8 = scalar_select 0, %s7, %s5
  $region1: #{tpu_custom_call.1} parent=0
    #allocation2 [shape = 'u8[32768]{0}', space=vmem, size = 0x8000, scoped, tag = 'input window, operand 3, single buffered']
    #allocation3 [shape = 's32[2]{0}', space=sflag, size = 0x8, scoped, tag = 'scoped memory for tpu_custom_call.1']
    #allocation4 [shape = 's32[2]{0}', space=sflag, size = 0x8, scoped, tag = 'scoped memory for tpu_custom_call.1']
    #allocation5 [shape = 'u8[8192]{0}', space=vmem, size = 0x2000, scoped, tag = 'output window, operand 0']
    %9 = vsyncpa [#allocation3], 0
    %10 = vsyncpa [#allocation4], 0
    %s11 = scalar_lea.sflag [#allocation4], 1
    %12 = vsyncpa %s11, 0
    loop: start=0, step=1, limit=4
    $region2: #{tpu_custom_call.1} parent=1 // loop_pre_header
      _
    $region3: #{tpu_custom_call.1} parent=1 // loop_header
      %s14 = sphi 0, %s18
      %p15 = scmp.ge.s32.totalorder %s14, 4
      %s24 = sphi 0, %s26
      %s27 = sphi 0, %s24
      %s28 = sphi 0, %s27
      %s44 = sphi 0, %s28
      %s48 = sphi 0, %s48
      %s50 = sphi 0, %s48
      %s51 = sphi 0, %s50
      %s65 = sphi 0, %s51
      %s69 = sphi 0, %s69
      %s71 = sphi 0, %s69
      %s72 = sphi 0, %s71
      %s86 = sphi 0, %s72
      %s90 = sphi 0, %s90
      %s92 = sphi 0, %s90
      %s93 = sphi 0, %s92
      %s107 = sphi 0, %s93
      %s113 = sphi 0, %s115
      %s116 = sphi 0, %s113
      %s117 = sphi 0, %s116
      %s133 = sphi 0, %s117
    $region4: #{tpu_custom_call.1} parent=1 // loop_header_branch
      %17 = sbr.rel (%p15) target = $region8
    $region5: #{tpu_custom_call.1} parent=1 // loop_body
      %s19 = ssub.s32 %s14, 1
      %s20 = ssub.s32 %s14, 2
      %s21 = sadd.s32 %s14, 1
      %s22 = ssub.s32 %s14, %s21
      %p23 = scmp.eq.s32.totalorder %s22, 0
      %s25 = sadd.s32 %s24, 1
      %s26 = scalar_select %p23, %s24, %s25
      %p29 = pneg %p23
      %p30 = scmp.eq.s32.totalorder %s14, 1
      %p31 = por %p29, %p30
      %p32 = scmp.ne.s32.totalorder %s24, %s27
      %p33 = scmp.eq.s32.totalorder %s14, 0
      %p34 = por %p32, %p33
      %p35 = scmp.ne.s32.totalorder %s24, %s27
      %p36 = scmp.eq.s32.totalorder %s19, 1
      %p37 = por %p35, %p36
      %p38 = scmp.ne.s32.totalorder %s27, %s28
      %p39 = scmp.eq.s32.totalorder %s19, 0
      %p40 = por %p38, %p39
      %p41 = scmp.ne.s32.totalorder %s27, %s28
      %p42 = scmp.eq.s32.totalorder %s20, 1
      %p43 = por %p41, %p42
      %p45 = scmp.ne.s32.totalorder %s28, %s44
      %p46 = scmp.eq.s32.totalorder %s20, 0
      %p47 = por %p45, %p46
      %s49 = sadd.s32 %s48, 1
      %p52 = scmp.eq.s32.totalorder %s14, 1
      %p53 = scmp.ne.s32.totalorder %s48, %s50
      %p54 = scmp.eq.s32.totalorder %s14, 0
      %p55 = por %p53, %p54
      %p56 = scmp.ne.s32.totalorder %s48, %s50
      %p57 = scmp.eq.s32.totalorder %s19, 1
      %p58 = por %p56, %p57
      %p59 = scmp.ne.s32.totalorder %s50, %s51
      %p60 = scmp.eq.s32.totalorder %s19, 0
      %p61 = por %p59, %p60
      %p62 = scmp.ne.s32.totalorder %s50, %s51
      %p63 = scmp.eq.s32.totalorder %s20, 1
      %p64 = por %p62, %p63
      %p66 = scmp.ne.s32.totalorder %s51, %s65
      %p67 = scmp.eq.s32.totalorder %s20, 0
      %p68 = por %p66, %p67
      %s70 = sadd.s32 %s69, 1
      %p73 = scmp.eq.s32.totalorder %s14, 1
      %p74 = scmp.ne.s32.totalorder %s69, %s71
      %p75 = scmp.eq.s32.totalorder %s14, 0
      %p76 = por %p74, %p75
      %p77 = scmp.ne.s32.totalorder %s69, %s71
      %p78 = scmp.eq.s32.totalorder %s19, 1
      %p79 = por %p77, %p78
      %p80 = scmp.ne.s32.totalorder %s71, %s72
      %p81 = scmp.eq.s32.totalorder %s19, 0
      %p82 = por %p80, %p81
      %p83 = scmp.ne.s32.totalorder %s71, %s72
      %p84 = scmp.eq.s32.totalorder %s20, 1
      %p85 = por %p83, %p84
      %p87 = scmp.ne.s32.totalorder %s72, %s86
      %p88 = scmp.eq.s32.totalorder %s20, 0
      %p89 = por %p87, %p88
      %s91 = sadd.s32 %s90, 1
      %p94 = scmp.eq.s32.totalorder %s14, 1
      %p95 = scmp.ne.s32.totalorder %s90, %s92
      %p96 = scmp.eq.s32.totalorder %s14, 0
      %p97 = por %p95, %p96
      %p98 = scmp.ne.s32.totalorder %s90, %s92
      %p99 = scmp.eq.s32.totalorder %s19, 1
      %p100 = por %p98, %p99
      %p101 = scmp.ne.s32.totalorder %s92, %s93
      %p102 = scmp.eq.s32.totalorder %s19, 0
      %p103 = por %p101, %p102
      %p104 = scmp.ne.s32.totalorder %s92, %s93
      %p105 = scmp.eq.s32.totalorder %s20, 1
      %p106 = por %p104, %p105
      %p108 = scmp.ne.s32.totalorder %s93, %s107
      %p109 = scmp.eq.s32.totalorder %s20, 0
      %p110 = por %p108, %p109
      %s111 = ssub.s32 %s14, %s21
      %p112 = scmp.eq.s32.totalorder %s111, 0
      %s114 = sadd.s32 %s113, 1
      %s115 = scalar_select %p112, %s113, %s114
      %p118 = pneg %p112
      %p119 = scmp.eq.s32.totalorder %s14, 1
      %p120 = por %p118, %p119
      %p121 = scmp.ne.s32.totalorder %s113, %s116
      %p122 = scmp.eq.s32.totalorder %s14, 0
      %p123 = por %p121, %p122
      %p124 = scmp.ne.s32.totalorder %s113, %s116
      %p125 = scmp.eq.s32.totalorder %s19, 1
      %p126 = por %p124, %p125
      %p127 = scmp.ne.s32.totalorder %s116, %s117
      %p128 = scmp.eq.s32.totalorder %s19, 0
      %p129 = por %p127, %p128
      %p130 = scmp.ne.s32.totalorder %s116, %s117
      %p131 = scmp.eq.s32.totalorder %s20, 1
      %p132 = por %p130, %p131
      %p134 = scmp.ne.s32.totalorder %s117, %s133
      %p135 = scmp.eq.s32.totalorder %s20, 0
      %p136 = por %p134, %p135
      %p137 = scmp.le.s32.totalorder 1, %s14
      %p138 = scmp.lt.s32.totalorder %s14, 3
      %p139 = pnand %p137, %p138
      %p140 = pneg %p139
      // Predicated region
      $region9: #{tpu_custom_call.1} parent=5 // pred_check
        _
      $region10: #{tpu_custom_call.1} parent=5 // pred_check_branch
        %142 = sbr.rel (%p139) target = $region12
      $region11: #{tpu_custom_call.1} parent=5 // pred_region
        %s143 = ssub.s32 %s14, 1
        // Predicated region
        $region13: #{tpu_custom_call.1} parent=11 // pred_check
          %p144 = pneg %p61
        $region14: #{tpu_custom_call.1} parent=11 // pred_check_branch
          %146 = sbr.rel (%p144) target = $region16
        $region15: #{tpu_custom_call.1} parent=11 // pred_region
          _
        $region16: #{tpu_custom_call.1} parent=11 // pred_fallthru
          _
        // Predicated region
        $region17: #{tpu_custom_call.1} parent=11 // pred_check
          %p147 = pneg %p82
        $region18: #{tpu_custom_call.1} parent=11 // pred_check_branch
          %149 = sbr.rel (%p147) target = $region20
        $region19: #{tpu_custom_call.1} parent=11 // pred_region
          _
        $region20: #{tpu_custom_call.1} parent=11 // pred_fallthru
          _
        // Predicated region
        $region21: #{tpu_custom_call.1} parent=11 // pred_check
          %p150 = pneg %p103
        $region22: #{tpu_custom_call.1} parent=11 // pred_check_branch
          %152 = sbr.rel (%p150) target = $region24
        $region23: #{tpu_custom_call.1} parent=11 // pred_region
          %s154 = ssub.s32 1024, 1024
          %155 = vsyncadd [#allocation3], %s154
          %s156 = sshll.u32 [#allocation2], 4
          %s157 = int_to_ptr.vmem [resolvable:$true] %s156
          %162 = dma.hbm_to_vmem [thread:$0]  %s3, 1024, %s157, [#allocation3], 128, 128, 8
        $region24: #{tpu_custom_call.1} parent=11 // pred_fallthru
          _
      $region12: #{tpu_custom_call.1} parent=5 // pred_fallthru
        _
      %p163 = scmp.lt.s32.totalorder %s14, 2
      // Predicated region
      $region25: #{tpu_custom_call.1} parent=5 // pred_check
        %p164 = pneg %p163
      $region26: #{tpu_custom_call.1} parent=5 // pred_check_branch
        %166 = sbr.rel (%p164) target = $region28
      $region27: #{tpu_custom_call.1} parent=5 // pred_region
        // Predicated region
        $region29: #{tpu_custom_call.1} parent=27 // pred_check
          %p167 = pneg %p34
        $region30: #{tpu_custom_call.1} parent=27 // pred_check_branch
          %169 = sbr.rel (%p167) target = $region32
        $region31: #{tpu_custom_call.1} parent=27 // pred_region
          %s170 = smul.u32 2, %s14
          %p171 = scmp.lt.s32.totalorder %s170, 3
          %s172 = scalar_select %p171, %s170, 3
          %s173 = smul.addr %s172, 4
          %s174 = scalar_lea.vmem %s0, %s173
          %s175 = smul.u32 2, %s14
        $region32: #{tpu_custom_call.1} parent=27 // pred_fallthru
          _
      $region28: #{tpu_custom_call.1} parent=5 // pred_fallthru
        _
      %p176 = scmp.le.s32.totalorder 1, %s14
      %p177 = scmp.lt.s32.totalorder %s14, 3
      %p178 = pnand %p176, %p177
      %p179 = pneg %p178
      // Predicated region
      $region33: #{tpu_custom_call.1} parent=5 // pred_check
        _
      $region34: #{tpu_custom_call.1} parent=5 // pred_check_branch
        %181 = sbr.rel (%p178) target = $region36
      $region35: #{tpu_custom_call.1} parent=5 // pred_region
        %s182 = ssub.s32 %s14, 1
        // Predicated region
        $region37: #{tpu_custom_call.1} parent=35 // pred_check
          %p183 = pneg %p103
        $region38: #{tpu_custom_call.1} parent=35 // pred_check_branch
          %185 = sbr.rel (%p183) target = $region40
        $region39: #{tpu_custom_call.1} parent=35 // pred_region
          %186 = dma.done [#allocation3], 1024
        $region40: #{tpu_custom_call.1} parent=35 // pred_fallthru
          _
        %s187 = smul.u32 2, %s19
        %p188 = scmp.lt.s32.totalorder %s187, 3
        %s189 = scalar_select %p188, %s187, 3
        %s190 = smul.addr %s189, 4
        %s191 = scalar_lea.vmem %s0, %s190
        %p192 = pneg %p40
        %p193 = pneg %p37
        %p194 = pneg %p61
        %p195 = pneg %p58
        %p196 = pneg %p82
        %p197 = pneg %p79
        %p198 = pneg %p103
        %p199 = pneg %p100
        %p200 = pneg %p129
        %p201 = pneg %p126
        %s202 = sand.u32 %s116, 1
        %s203 = scalar_lea.sflag [#allocation4], %s202
        %s204 = sand.u32 %s116, 1
        %s205 = smul.addr %s204, 8
        %s206 = scalar_lea.vmem [#allocation5], %s205
        %s207 = smul.u32 2, %s19
        %p208 = scmp.lt.s32.totalorder %s207, 3
        %s209 = scalar_select %p208, %s207, 3
        %s210 = smul.addr %s209, 4
        %s211 = scalar_lea.vmem %s0, %s210
        %s212 = smul.u32 2, %s19
        %s213 = smul.u32 2, %s19
        %v214 = vld [vmem:[%s1] sm:$0xff]
        %v215 = vld [vmem:[%s1 + $0x8] sm:$0xf]
        %v216 = vld [vmem:[%s211] sm:$0xff]
        %v217 = vld [vmem:[%s2] sm:$0xff]
        %v218 = vld [vmem:[%s2 + $0x8] sm:$0xf]
        %220 = vset.pattern.permute.xlu0 0
        %221 = vperm.xlu0 %220, %v217
        %v222 = vpop.permute.xlu0 %221
        %225 = vset.pattern.permute.xlu0 0
        %226 = vperm.xlu0 %225, %v218
        %v227 = vpop.permute.xlu0 %226
        %v230 = vcombine.high %v216, %v216
        %vm231 = vcmask 31744
        %v233 = vsel %vm231, %v214, 0
        %v236 = vsel %vm231, %v215, 0
        %vm238 = vcmask 1043456
        %v239 = vsel %vm238, %v216, 0
        %v241 = vsel %vm238, %v230, 0
        %243 = vmatprep.subr.mxu0 %v241
        %244 = vmatpush1.msra.mxu0 %v239
        %245 = vmatprep.subr.mxu0 0.0
        %246 = vmatpush1.msra.mxu0 0.0
        %247 = vmatprep.subr.mxu0 0.0
        %248 = vmatpush1.msra.mxu0 0.0
        %249 = vmatprep.subr.mxu0 0.0
        %250 = vmatpush1.msra.mxu0 0.0
        %251 = vmatprep.subr.mxu0 0.0
        %252 = vmatpush1.msra.mxu0 0.0
        %253 = vmatprep.subr.mxu0 0.0
        %254 = vmatpush1.msra.mxu0 0.0
        %255 = vmatprep.subr.mxu0 0.0
        %256 = vmatpush1.msra.mxu0 0.0
        %257 = vmatprep.subr.mxu0 0.0
        %258 = vmatpush1.msra.mxu0 0.0
        %259 = vmatprep.subr.mxu0 0.0
        %260 = vmatpush1.msra.mxu0 0.0
        %261 = vmatprep.subr.mxu0 0.0
        %262 = vmatpush1.msra.mxu0 0.0
        %263 = vmatprep.subr.mxu0 0.0
        %264 = vmatpush1.msra.mxu0 0.0
        %265 = vmatprep.subr.mxu0 0.0
        %266 = vmatpush1.msra.mxu0 0.0
        %267 = vmatprep.subr.mxu0 0.0
        %268 = vmatpush1.msra.mxu0 0.0
        %269 = vmatprep.subr.mxu0 0.0
        %270 = vmatpush1.msra.mxu0 0.0
        %271 = vmatprep.subr.mxu0 0.0
        %272 = vmatpush1.msra.mxu0 0.0
        %273 = vmatprep.subr.mxu0 0.0
        %274 = vmatpush1.msra.mxu0 0.0
        %275 = vmatprep.subr.mxu0 0.0
        %276 = vmatpush1.msra.mxu0 0.0
        %277 = vmatprep.subr.mxu0 0.0
        %278 = vmatpush1.msra.mxu0 0.0
        %279 = vmatprep.subr.mxu0 0.0
        %280 = vmatpush1.msra.mxu0 0.0
        %281 = vmatprep.subr.mxu0 0.0
        %282 = vmatpush1.msra.mxu0 0.0
        %283 = vmatprep.subr.mxu0 0.0
        %284 = vmatpush1.msra.mxu0 0.0
        %285 = vmatprep.subr.mxu0 0.0
        %286 = vmatpush1.msra.mxu0 0.0
        %287 = vmatprep.subr.mxu0 0.0
        %288 = vmatpush1.msra.mxu0 0.0
        %289 = vmatprep.subr.mxu0 0.0
        %290 = vmatpush1.msra.mxu0 0.0
        %291 = vmatprep.subr.mxu0 0.0
        %292 = vmatpush1.msra.mxu0 0.0
        %293 = vmatprep.subr.mxu0 0.0
        %294 = vmatpush1.msra.mxu0 0.0
        %295 = vmatprep.subr.mxu0 0.0
        %296 = vmatpush1.msra.mxu0 0.0
        %297 = vmatprep.subr.mxu0 0.0
        %298 = vmatpush1.msra.mxu0 0.0
        %299 = vmatprep.subr.mxu0 0.0
        %300 = vmatpush1.msra.mxu0 0.0
        %301 = vmatprep.subr.mxu0 0.0
        %302 = vmatpush1.msra.mxu0 0.0
        %303 = vmatprep.subr.mxu0 0.0
        %304 = vmatpush1.msra.mxu0 0.0
        %305 = vmatprep.subr.mxu0 0.0
        %306 = vmatpush1.msra.mxu0 0.0
        %307 = vmatprep.mubr.f32.mxu0 0.0
        %308 = vmatmul.mubr.f32.gmra.mrb[0].mxu0 %v233
        %v309 = vpop.f32.mrb[0].mxu0
        %v310 = vadd.f32 %v222, %v309
        %v311 = vpop.f32.mrb[0].mxu0
        %v312 = vadd.f32 %v222, %v311
        %313 = vmatprep.mubr.f32.mxu0 0.0
        %314 = vmatmul.mubr.f32.gmra.mrb[0].mxu0 %v236
        %v315 = vpop.f32.mrb[0].mxu0
        %v316 = vadd.f32 %v227, %v315
        %v317 = vpop.f32.mrb[0].mxu0
        %v318 = vadd.f32 %v227, %v317
        %319 = vdwg.mxu0
        %322 = vrot.lane.b32.xlu0 %v310, 112
        %v323 = vpop.permute.xlu0 %322
        %324 = vrot.lane.b32.xlu0 %v316, 112
        %v325 = vpop.permute.xlu0 %324
        %328 = vrot.lane.b32.xlu0 %v310, 96
        %v329 = vpop.permute.xlu0 %328
        %330 = vrot.lane.b32.xlu0 %v316, 96
        %v331 = vpop.permute.xlu0 %330
        %334 = vrot.lane.b32.xlu0 %v310, 80
        %v335 = vpop.permute.xlu0 %334
        %336 = vrot.lane.b32.xlu0 %v316, 80
        %v337 = vpop.permute.xlu0 %336
        %340 = vrot.lane.b32.xlu0 %v310, 64
        %v341 = vpop.permute.xlu0 %340
        %342 = vrot.lane.b32.xlu0 %v316, 64
        %v343 = vpop.permute.xlu0 %342
        %346 = vrot.lane.b32.xlu0 %v310, 48
        %v347 = vpop.permute.xlu0 %346
        %348 = vrot.lane.b32.xlu0 %v316, 48
        %v349 = vpop.permute.xlu0 %348
        %352 = vrot.lane.b32.xlu0 %v310, 32
        %v353 = vpop.permute.xlu0 %352
        %354 = vrot.lane.b32.xlu0 %v316, 32
        %v355 = vpop.permute.xlu0 %354
        %358 = vrot.lane.b32.xlu0 %v310, 16
        %v359 = vpop.permute.xlu0 %358
        %360 = vrot.lane.b32.xlu0 %v316, 16
        %v361 = vpop.permute.xlu0 %360
        %366 = vrot.lane.b32.xlu0 %v312, 112
        %v367 = vpop.permute.xlu0 %366
        %368 = vrot.lane.b32.xlu0 %v318, 112
        %v369 = vpop.permute.xlu0 %368
        %372 = vrot.lane.b32.xlu0 %v312, 96
        %v373 = vpop.permute.xlu0 %372
        %374 = vrot.lane.b32.xlu0 %v318, 96
        %v375 = vpop.permute.xlu0 %374
        %378 = vrot.lane.b32.xlu0 %v312, 80
        %v379 = vpop.permute.xlu0 %378
        %380 = vrot.lane.b32.xlu0 %v318, 80
        %v381 = vpop.permute.xlu0 %380
        %384 = vrot.lane.b32.xlu0 %v312, 64
        %v385 = vpop.permute.xlu0 %384
        %386 = vrot.lane.b32.xlu0 %v318, 64
        %v387 = vpop.permute.xlu0 %386
        %390 = vrot.lane.b32.xlu0 %v312, 48
        %v391 = vpop.permute.xlu0 %390
        %392 = vrot.lane.b32.xlu0 %v318, 48
        %v393 = vpop.permute.xlu0 %392
        %396 = vrot.lane.b32.xlu0 %v312, 32
        %v397 = vpop.permute.xlu0 %396
        %398 = vrot.lane.b32.xlu0 %v318, 32
        %v399 = vpop.permute.xlu0 %398
        %402 = vrot.lane.b32.xlu0 %v312, 16
        %v403 = vpop.permute.xlu0 %402
        %404 = vrot.lane.b32.xlu0 %v318, 16
        %v405 = vpop.permute.xlu0 %404
        %v408 = vcombine.low %v310, %v329
        %v409 = vcombine.high %v310, %v329
        %v411 = vunpack.c.l.s4 1983009808
        %v412 = vunpack.c.0.s8 %v411
        %v413 = vlaneseq
        %v414 = vshrl.u32 %v413, 7
        %v415 = vsub.s32 %v412, %v414
        %v416 = vrot.slane %v408, %v415
        %v418 = vunpack.c.l.s4 1983009808
        %v419 = vunpack.c.0.s8 %v418
        %v420 = vlaneseq
        %v421 = vshrl.u32 %v420, 7
        %v422 = vsub.s32 %v419, %v421
        %v423 = vrot.slane %v409, %v422
        %v424 = vcombine.low %v323, %v335
        %v425 = vcombine.high %v323, %v335
        %v427 = vunpack.c.l.s4 1983009808
        %v428 = vunpack.c.0.s8 %v427
        %v429 = vlaneseq
        %v430 = vshrl.u32 %v429, 7
        %v431 = vsub.s32 %v428, %v430
        %v432 = vrot.slane %v424, %v431
        %v434 = vunpack.c.l.s4 1983009808
        %v435 = vunpack.c.0.s8 %v434
        %v436 = vlaneseq
        %v437 = vshrl.u32 %v436, 7
        %v438 = vsub.s32 %v435, %v437
        %v439 = vrot.slane %v425, %v438
        %v440 = vcombine.low %v341, %v353
        %v441 = vcombine.high %v341, %v353
        %v443 = vunpack.c.l.s4 1983009808
        %v444 = vunpack.c.0.s8 %v443
        %v445 = vlaneseq
        %v446 = vshrl.u32 %v445, 7
        %v447 = vsub.s32 %v444, %v446
        %v448 = vrot.slane %v440, %v447
        %v450 = vunpack.c.l.s4 1983009808
        %v451 = vunpack.c.0.s8 %v450
        %v452 = vlaneseq
        %v453 = vshrl.u32 %v452, 7
        %v454 = vsub.s32 %v451, %v453
        %v455 = vrot.slane %v441, %v454
        %v456 = vcombine.low %v347, %v359
        %v457 = vcombine.high %v347, %v359
        %v459 = vunpack.c.l.s4 1983009808
        %v460 = vunpack.c.0.s8 %v459
        %v461 = vlaneseq
        %v462 = vshrl.u32 %v461, 7
        %v463 = vsub.s32 %v460, %v462
        %v464 = vrot.slane %v456, %v463
        %v466 = vunpack.c.l.s4 1983009808
        %v467 = vunpack.c.0.s8 %v466
        %v468 = vlaneseq
        %v469 = vshrl.u32 %v468, 7
        %v470 = vsub.s32 %v467, %v469
        %v471 = vrot.slane %v457, %v470
        %v472 = vcombine.low %v416, %v432
        %v473 = vcombine.high %v416, %v432
        %v475 = vunpack.c.l.s4 1934713408
        %v476 = vunpack.c.0.s8 %v475
        %v477 = vlaneseq
        %v478 = vshrl.u32 %v477, 7
        %v479 = vsub.s32 %v476, %v478
        %v480 = vrot.slane %v472, %v479
        %v482 = vunpack.c.l.s4 1934713408
        %v483 = vunpack.c.0.s8 %v482
        %v484 = vlaneseq
        %v485 = vshrl.u32 %v484, 7
        %v486 = vsub.s32 %v483, %v485
        %v487 = vrot.slane %v473, %v486
        %v488 = vcombine.low %v423, %v439
        %v489 = vcombine.high %v423, %v439
        %v491 = vunpack.c.l.s4 1934713408
        %v492 = vunpack.c.0.s8 %v491
        %v493 = vlaneseq
        %v494 = vshrl.u32 %v493, 7
        %v495 = vsub.s32 %v492, %v494
        %v496 = vrot.slane %v488, %v495
        %v498 = vunpack.c.l.s4 1934713408
        %v499 = vunpack.c.0.s8 %v498
        %v500 = vlaneseq
        %v501 = vshrl.u32 %v500, 7
        %v502 = vsub.s32 %v499, %v501
        %v503 = vrot.slane %v489, %v502
        %v504 = vcombine.low %v448, %v464
        %v505 = vcombine.high %v448, %v464
        %v507 = vunpack.c.l.s4 1934713408
        %v508 = vunpack.c.0.s8 %v507
        %v509 = vlaneseq
        %v510 = vshrl.u32 %v509, 7
        %v511 = vsub.s32 %v508, %v510
        %v512 = vrot.slane %v504, %v511
        %v514 = vunpack.c.l.s4 1934713408
        %v515 = vunpack.c.0.s8 %v514
        %v516 = vlaneseq
        %v517 = vshrl.u32 %v516, 7
        %v518 = vsub.s32 %v515, %v517
        %v519 = vrot.slane %v505, %v518
        %v520 = vcombine.low %v455, %v471
        %v521 = vcombine.high %v455, %v471
        %v523 = vunpack.c.l.s4 1934713408
        %v524 = vunpack.c.0.s8 %v523
        %v525 = vlaneseq
        %v526 = vshrl.u32 %v525, 7
        %v527 = vsub.s32 %v524, %v526
        %v528 = vrot.slane %v520, %v527
        %v530 = vunpack.c.l.s4 1934713408
        %v531 = vunpack.c.0.s8 %v530
        %v532 = vlaneseq
        %v533 = vshrl.u32 %v532, 7
        %v534 = vsub.s32 %v531, %v533
        %v535 = vrot.slane %v521, %v534
        %v536 = vcombine.low %v480, %v512
        %v537 = vcombine.high %v480, %v512
        %v538 = vcombine.low %v487, %v519
        %v539 = vcombine.high %v487, %v519
        %v540 = vcombine.low %v496, %v528
        %v541 = vcombine.high %v496, %v528
        %v542 = vcombine.low %v503, %v535
        %v543 = vcombine.high %v503, %v535
        %v544 = vcombine.low %v312, %v373
        %v545 = vcombine.high %v312, %v373
        %v547 = vunpack.c.l.s4 1983009808
        %v548 = vunpack.c.0.s8 %v547
        %v549 = vlaneseq
        %v550 = vshrl.u32 %v549, 7
        %v551 = vsub.s32 %v548, %v550
        %v552 = vrot.slane %v544, %v551
        %v554 = vunpack.c.l.s4 1983009808
        %v555 = vunpack.c.0.s8 %v554
        %v556 = vlaneseq
        %v557 = vshrl.u32 %v556, 7
        %v558 = vsub.s32 %v555, %v557
        %v559 = vrot.slane %v545, %v558
        %v560 = vcombine.low %v367, %v379
        %v561 = vcombine.high %v367, %v379
        %v563 = vunpack.c.l.s4 1983009808
        %v564 = vunpack.c.0.s8 %v563
        %v565 = vlaneseq
        %v566 = vshrl.u32 %v565, 7
        %v567 = vsub.s32 %v564, %v566
        %v568 = vrot.slane %v560, %v567
        %v570 = vunpack.c.l.s4 1983009808
        %v571 = vunpack.c.0.s8 %v570
        %v572 = vlaneseq
        %v573 = vshrl.u32 %v572, 7
        %v574 = vsub.s32 %v571, %v573
        %v575 = vrot.slane %v561, %v574
        %v576 = vcombine.low %v385, %v397
        %v577 = vcombine.high %v385, %v397
        %v579 = vunpack.c.l.s4 1983009808
        %v580 = vunpack.c.0.s8 %v579
        %v581 = vlaneseq
        %v582 = vshrl.u32 %v581, 7
        %v583 = vsub.s32 %v580, %v582
        %v584 = vrot.slane %v576, %v583
        %v586 = vunpack.c.l.s4 1983009808
        %v587 = vunpack.c.0.s8 %v586
        %v588 = vlaneseq
        %v589 = vshrl.u32 %v588, 7
        %v590 = vsub.s32 %v587, %v589
        %v591 = vrot.slane %v577, %v590
        %v592 = vcombine.low %v391, %v403
        %v593 = vcombine.high %v391, %v403
        %v595 = vunpack.c.l.s4 1983009808
        %v596 = vunpack.c.0.s8 %v595
        %v597 = vlaneseq
        %v598 = vshrl.u32 %v597, 7
        %v599 = vsub.s32 %v596, %v598
        %v600 = vrot.slane %v592, %v599
        %v602 = vunpack.c.l.s4 1983009808
        %v603 = vunpack.c.0.s8 %v602
        %v604 = vlaneseq
        %v605 = vshrl.u32 %v604, 7
        %v606 = vsub.s32 %v603, %v605
        %v607 = vrot.slane %v593, %v606
        %v608 = vcombine.low %v552, %v568
        %v609 = vcombine.high %v552, %v568
        %v611 = vunpack.c.l.s4 1934713408
        %v612 = vunpack.c.0.s8 %v611
        %v613 = vlaneseq
        %v614 = vshrl.u32 %v613, 7
        %v615 = vsub.s32 %v612, %v614
        %v616 = vrot.slane %v608, %v615
        %v618 = vunpack.c.l.s4 1934713408
        %v619 = vunpack.c.0.s8 %v618
        %v620 = vlaneseq
        %v621 = vshrl.u32 %v620, 7
        %v622 = vsub.s32 %v619, %v621
        %v623 = vrot.slane %v609, %v622
        %v624 = vcombine.low %v559, %v575
        %v625 = vcombine.high %v559, %v575
        %v627 = vunpack.c.l.s4 1934713408
        %v628 = vunpack.c.0.s8 %v627
        %v629 = vlaneseq
        %v630 = vshrl.u32 %v629, 7
        %v631 = vsub.s32 %v628, %v630
        %v632 = vrot.slane %v624, %v631
        %v634 = vunpack.c.l.s4 1934713408
        %v635 = vunpack.c.0.s8 %v634
        %v636 = vlaneseq
        %v637 = vshrl.u32 %v636, 7
        %v638 = vsub.s32 %v635, %v637
        %v639 = vrot.slane %v625, %v638
        %v640 = vcombine.low %v584, %v600
        %v641 = vcombine.high %v584, %v600
        %v643 = vunpack.c.l.s4 1934713408
        %v644 = vunpack.c.0.s8 %v643
        %v645 = vlaneseq
        %v646 = vshrl.u32 %v645, 7
        %v647 = vsub.s32 %v644, %v646
        %v648 = vrot.slane %v640, %v647
        %v650 = vunpack.c.l.s4 1934713408
        %v651 = vunpack.c.0.s8 %v650
        %v652 = vlaneseq
        %v653 = vshrl.u32 %v652, 7
        %v654 = vsub.s32 %v651, %v653
        %v655 = vrot.slane %v641, %v654
        %v656 = vcombine.low %v591, %v607
        %v657 = vcombine.high %v591, %v607
        %v659 = vunpack.c.l.s4 1934713408
        %v660 = vunpack.c.0.s8 %v659
        %v661 = vlaneseq
        %v662 = vshrl.u32 %v661, 7
        %v663 = vsub.s32 %v660, %v662
        %v664 = vrot.slane %v656, %v663
        %v666 = vunpack.c.l.s4 1934713408
        %v667 = vunpack.c.0.s8 %v666
        %v668 = vlaneseq
        %v669 = vshrl.u32 %v668, 7
        %v670 = vsub.s32 %v667, %v669
        %v671 = vrot.slane %v657, %v670
        %v672 = vcombine.low %v616, %v648
        %v673 = vcombine.high %v616, %v648
        %v674 = vcombine.low %v623, %v655
        %v675 = vcombine.high %v623, %v655
        %v676 = vcombine.low %v632, %v664
        %v677 = vcombine.high %v632, %v664
        %v678 = vcombine.low %v639, %v671
        %v679 = vcombine.high %v639, %v671
        %v680 = vcombine.low %v316, %v331
        %v682 = vunpack.c.l.s4 1983009808
        %v683 = vunpack.c.0.s8 %v682
        %v684 = vlaneseq
        %v685 = vshrl.u32 %v684, 7
        %v686 = vsub.s32 %v683, %v685
        %v687 = vrot.slane %v680, %v686
        %v688 = vcombine.low %v325, %v337
        %v690 = vunpack.c.l.s4 1983009808
        %v691 = vunpack.c.0.s8 %v690
        %v692 = vlaneseq
        %v693 = vshrl.u32 %v692, 7
        %v694 = vsub.s32 %v691, %v693
        %v695 = vrot.slane %v688, %v694
        %v696 = vcombine.low %v343, %v355
        %v698 = vunpack.c.l.s4 1983009808
        %v699 = vunpack.c.0.s8 %v698
        %v700 = vlaneseq
        %v701 = vshrl.u32 %v700, 7
        %v702 = vsub.s32 %v699, %v701
        %v703 = vrot.slane %v696, %v702
        %v704 = vcombine.low %v349, %v361
        %v706 = vunpack.c.l.s4 1983009808
        %v707 = vunpack.c.0.s8 %v706
        %v708 = vlaneseq
        %v709 = vshrl.u32 %v708, 7
        %v710 = vsub.s32 %v707, %v709
        %v711 = vrot.slane %v704, %v710
        %v712 = vcombine.low %v687, %v695
        %v713 = vcombine.high %v687, %v695
        %v715 = vunpack.c.l.s4 1934713408
        %v716 = vunpack.c.0.s8 %v715
        %v717 = vlaneseq
        %v718 = vshrl.u32 %v717, 7
        %v719 = vsub.s32 %v716, %v718
        %v720 = vrot.slane %v712, %v719
        %v722 = vunpack.c.l.s4 1934713408
        %v723 = vunpack.c.0.s8 %v722
        %v724 = vlaneseq
        %v725 = vshrl.u32 %v724, 7
        %v726 = vsub.s32 %v723, %v725
        %v727 = vrot.slane %v713, %v726
        %v728 = vcombine.low %v703, %v711
        %v729 = vcombine.high %v703, %v711
        %v731 = vunpack.c.l.s4 1934713408
        %v732 = vunpack.c.0.s8 %v731
        %v733 = vlaneseq
        %v734 = vshrl.u32 %v733, 7
        %v735 = vsub.s32 %v732, %v734
        %v736 = vrot.slane %v728, %v735
        %v738 = vunpack.c.l.s4 1934713408
        %v739 = vunpack.c.0.s8 %v738
        %v740 = vlaneseq
        %v741 = vshrl.u32 %v740, 7
        %v742 = vsub.s32 %v739, %v741
        %v743 = vrot.slane %v729, %v742
        %v744 = vcombine.low %v720, %v736
        %v745 = vcombine.high %v720, %v736
        %v746 = vcombine.low %v727, %v743
        %v747 = vcombine.high %v727, %v743
        %v748 = vcombine.low %v318, %v375
        %v750 = vunpack.c.l.s4 1983009808
        %v751 = vunpack.c.0.s8 %v750
        %v752 = vlaneseq
        %v753 = vshrl.u32 %v752, 7
        %v754 = vsub.s32 %v751, %v753
        %v755 = vrot.slane %v748, %v754
        %v756 = vcombine.low %v369, %v381
        %v758 = vunpack.c.l.s4 1983009808
        %v759 = vunpack.c.0.s8 %v758
        %v760 = vlaneseq
        %v761 = vshrl.u32 %v760, 7
        %v762 = vsub.s32 %v759, %v761
        %v763 = vrot.slane %v756, %v762
        %v764 = vcombine.low %v387, %v399
        %v766 = vunpack.c.l.s4 1983009808
        %v767 = vunpack.c.0.s8 %v766
        %v768 = vlaneseq
        %v769 = vshrl.u32 %v768, 7
        %v770 = vsub.s32 %v767, %v769
        %v771 = vrot.slane %v764, %v770
        %v772 = vcombine.low %v393, %v405
        %v774 = vunpack.c.l.s4 1983009808
        %v775 = vunpack.c.0.s8 %v774
        %v776 = vlaneseq
        %v777 = vshrl.u32 %v776, 7
        %v778 = vsub.s32 %v775, %v777
        %v779 = vrot.slane %v772, %v778
        %v780 = vcombine.low %v755, %v763
        %v781 = vcombine.high %v755, %v763
        %v783 = vunpack.c.l.s4 1934713408
        %v784 = vunpack.c.0.s8 %v783
        %v785 = vlaneseq
        %v786 = vshrl.u32 %v785, 7
        %v787 = vsub.s32 %v784, %v786
        %v788 = vrot.slane %v780, %v787
        %v790 = vunpack.c.l.s4 1934713408
        %v791 = vunpack.c.0.s8 %v790
        %v792 = vlaneseq
        %v793 = vshrl.u32 %v792, 7
        %v794 = vsub.s32 %v791, %v793
        %v795 = vrot.slane %v781, %v794
        %v796 = vcombine.low %v771, %v779
        %v797 = vcombine.high %v771, %v779
        %v799 = vunpack.c.l.s4 1934713408
        %v800 = vunpack.c.0.s8 %v799
        %v801 = vlaneseq
        %v802 = vshrl.u32 %v801, 7
        %v803 = vsub.s32 %v800, %v802
        %v804 = vrot.slane %v796, %v803
        %v806 = vunpack.c.l.s4 1934713408
        %v807 = vunpack.c.0.s8 %v806
        %v808 = vlaneseq
        %v809 = vshrl.u32 %v808, 7
        %v810 = vsub.s32 %v807, %v809
        %v811 = vrot.slane %v797, %v810
        %v812 = vcombine.low %v788, %v804
        %v813 = vcombine.high %v788, %v804
        %v814 = vcombine.low %v795, %v811
        %v815 = vcombine.high %v795, %v811
        %v816 = vld [vmem:[#allocation2] sm:$0xff]
        %v817 = vld [vmem:[#allocation2 + $0x8] sm:$0xff]
        %v818 = vld [vmem:[#allocation2 + $0x10] sm:$0xff]
        %v819 = vld [vmem:[#allocation2 + $0x18] sm:$0xff]
        %v820 = vld [vmem:[#allocation2 + $0x20] sm:$0xff]
        %v821 = vld [vmem:[#allocation2 + $0x28] sm:$0xff]
        %v822 = vld [vmem:[#allocation2 + $0x30] sm:$0xff]
        %v823 = vld [vmem:[#allocation2 + $0x38] sm:$0xff]
        %v824 = vadd.f32 %v540, %v816
        %v825 = vadd.f32 %v676, %v817
        %v826 = vadd.f32 %v541, %v818
        %v827 = vadd.f32 %v677, %v819
        %v828 = vadd.f32 %v542, %v820
        %v829 = vadd.f32 %v678, %v821
        %v830 = vadd.f32 %v543, %v822
        %v831 = vadd.f32 %v679, %v823
        %vm832 = vcmask 130048
        %v834 = vsel %vm832, %v536, 0
        %v837 = vsel %vm832, %v672, 0
        %v840 = vsel %vm832, %v824, 0
        %v843 = vsel %vm832, %v825, 0
        %845 = vmatprep.subr.mxu0 0.0
        %846 = vmatpush1.xpose.msra.mxu0 %v840
        %847 = vmatprep.subr.mxu0 0.0
        %848 = vmatpush1.xpose.msra.mxu0 %v843
        %849 = vmatprep.subr.mxu0 0.0
        %850 = vmatpush1.xpose.msra.mxu0 0.0
        %851 = vmatprep.subr.mxu0 0.0
        %852 = vmatpush1.xpose.msra.mxu0 0.0
        %853 = vmatprep.subr.mxu0 0.0
        %854 = vmatpush1.xpose.msra.mxu0 0.0
        %855 = vmatprep.subr.mxu0 0.0
        %856 = vmatpush1.xpose.msra.mxu0 0.0
        %857 = vmatprep.subr.mxu0 0.0
        %858 = vmatpush1.xpose.msra.mxu0 0.0
        %859 = vmatprep.subr.mxu0 0.0
        %860 = vmatpush1.xpose.msra.mxu0 0.0
        %861 = vmatprep.subr.mxu0 0.0
        %862 = vmatpush1.xpose.msra.mxu0 0.0
        %863 = vmatprep.subr.mxu0 0.0
        %864 = vmatpush1.xpose.msra.mxu0 0.0
        %865 = vmatprep.subr.mxu0 0.0
        %866 = vmatpush1.xpose.msra.mxu0 0.0
        %867 = vmatprep.subr.mxu0 0.0
        %868 = vmatpush1.xpose.msra.mxu0 0.0
        %869 = vmatprep.subr.mxu0 0.0
        %870 = vmatpush1.xpose.msra.mxu0 0.0
        %871 = vmatprep.subr.mxu0 0.0
        %872 = vmatpush1.xpose.msra.mxu0 0.0
        %873 = vmatprep.subr.mxu0 0.0
        %874 = vmatpush1.xpose.msra.mxu0 0.0
        %875 = vmatprep.subr.mxu0 0.0
        %876 = vmatpush1.xpose.msra.mxu0 0.0
        %877 = vmatprep.subr.mxu0 0.0
        %878 = vmatpush1.xpose.msra.mxu0 0.0
        %879 = vmatprep.subr.mxu0 0.0
        %880 = vmatpush1.xpose.msra.mxu0 0.0
        %881 = vmatprep.subr.mxu0 0.0
        %882 = vmatpush1.xpose.msra.mxu0 0.0
        %883 = vmatprep.subr.mxu0 0.0
        %884 = vmatpush1.xpose.msra.mxu0 0.0
        %885 = vmatprep.subr.mxu0 0.0
        %886 = vmatpush1.xpose.msra.mxu0 0.0
        %887 = vmatprep.subr.mxu0 0.0
        %888 = vmatpush1.xpose.msra.mxu0 0.0
        %889 = vmatprep.subr.mxu0 0.0
        %890 = vmatpush1.xpose.msra.mxu0 0.0
        %891 = vmatprep.subr.mxu0 0.0
        %892 = vmatpush1.xpose.msra.mxu0 0.0
        %893 = vmatprep.subr.mxu0 0.0
        %894 = vmatpush1.xpose.msra.mxu0 0.0
        %895 = vmatprep.subr.mxu0 0.0
        %896 = vmatpush1.xpose.msra.mxu0 0.0
        %897 = vmatprep.subr.mxu0 0.0
        %898 = vmatpush1.xpose.msra.mxu0 0.0
        %899 = vmatprep.subr.mxu0 0.0
        %900 = vmatpush1.xpose.msra.mxu0 0.0
        %901 = vmatprep.subr.mxu0 0.0
        %902 = vmatpush1.xpose.msra.mxu0 0.0
        %903 = vmatprep.subr.mxu0 0.0
        %904 = vmatpush1.xpose.msra.mxu0 0.0
        %905 = vmatprep.subr.mxu0 0.0
        %906 = vmatpush1.xpose.msra.mxu0 0.0
        %907 = vmatprep.subr.mxu0 0.0
        %908 = vmatpush1.xpose.msra.mxu0 0.0
        %909 = vmatprep.mubr.f32.mxu0 0.0
        %910 = vmatmul.mubr.f32.gmra.mrb[0].mxu0 %v834
        %v911 = vpop.f32.mrb[0].mxu0
        %v912 = vadd.f32 0.0, %v911
        %v913 = vpop.f32.mrb[0].mxu0
        %914 = vmatprep.mubr.f32.mxu0 0.0
        %915 = vmatmul.mubr.f32.gmra.mrb[0].mxu0 %v837
        %v916 = vpop.f32.mrb[0].mxu0
        %v917 = vadd.f32 0.0, %v916
        %v918 = vpop.f32.mrb[0].mxu0
        %919 = vdwg.mxu0
        %v921 = vsel %vm832, %v537, 0
        %v924 = vsel %vm832, %v673, 0
        %v927 = vsel %vm832, %v826, 0
        %v930 = vsel %vm832, %v827, 0
        %932 = vmatprep.subr.mxu0 0.0
        %933 = vmatpush1.xpose.msra.mxu0 %v927
        %934 = vmatprep.subr.mxu0 0.0
        %935 = vmatpush1.xpose.msra.mxu0 %v930
        %936 = vmatprep.subr.mxu0 0.0
        %937 = vmatpush1.xpose.msra.mxu0 0.0
        %938 = vmatprep.subr.mxu0 0.0
        %939 = vmatpush1.xpose.msra.mxu0 0.0
        %940 = vmatprep.subr.mxu0 0.0
        %941 = vmatpush1.xpose.msra.mxu0 0.0
        %942 = vmatprep.subr.mxu0 0.0
        %943 = vmatpush1.xpose.msra.mxu0 0.0
        %944 = vmatprep.subr.mxu0 0.0
        %945 = vmatpush1.xpose.msra.mxu0 0.0
        %946 = vmatprep.subr.mxu0 0.0
        %947 = vmatpush1.xpose.msra.mxu0 0.0
        %948 = vmatprep.subr.mxu0 0.0
        %949 = vmatpush1.xpose.msra.mxu0 0.0
        %950 = vmatprep.subr.mxu0 0.0
        %951 = vmatpush1.xpose.msra.mxu0 0.0
        %952 = vmatprep.subr.mxu0 0.0
        %953 = vmatpush1.xpose.msra.mxu0 0.0
        %954 = vmatprep.subr.mxu0 0.0
        %955 = vmatpush1.xpose.msra.mxu0 0.0
        %956 = vmatprep.subr.mxu0 0.0
        %957 = vmatpush1.xpose.msra.mxu0 0.0
        %958 = vmatprep.subr.mxu0 0.0
        %959 = vmatpush1.xpose.msra.mxu0 0.0
        %960 = vmatprep.subr.mxu0 0.0
        %961 = vmatpush1.xpose.msra.mxu0 0.0
        %962 = vmatprep.subr.mxu0 0.0
        %963 = vmatpush1.xpose.msra.mxu0 0.0
        %964 = vmatprep.subr.mxu0 0.0
        %965 = vmatpush1.xpose.msra.mxu0 0.0
        %966 = vmatprep.subr.mxu0 0.0
        %967 = vmatpush1.xpose.msra.mxu0 0.0
        %968 = vmatprep.subr.mxu0 0.0
        %969 = vmatpush1.xpose.msra.mxu0 0.0
        %970 = vmatprep.subr.mxu0 0.0
        %971 = vmatpush1.xpose.msra.mxu0 0.0
        %972 = vmatprep.subr.mxu0 0.0
        %973 = vmatpush1.xpose.msra.mxu0 0.0
        %974 = vmatprep.subr.mxu0 0.0
        %975 = vmatpush1.xpose.msra.mxu0 0.0
        %976 = vmatprep.subr.mxu0 0.0
        %977 = vmatpush1.xpose.msra.mxu0 0.0
        %978 = vmatprep.subr.mxu0 0.0
        %979 = vmatpush1.xpose.msra.mxu0 0.0
        %980 = vmatprep.subr.mxu0 0.0
        %981 = vmatpush1.xpose.msra.mxu0 0.0
        %982 = vmatprep.subr.mxu0 0.0
        %983 = vmatpush1.xpose.msra.mxu0 0.0
        %984 = vmatprep.subr.mxu0 0.0
        %985 = vmatpush1.xpose.msra.mxu0 0.0
        %986 = vmatprep.subr.mxu0 0.0
        %987 = vmatpush1.xpose.msra.mxu0 0.0
        %988 = vmatprep.subr.mxu0 0.0
        %989 = vmatpush1.xpose.msra.mxu0 0.0
        %990 = vmatprep.subr.mxu0 0.0
        %991 = vmatpush1.xpose.msra.mxu0 0.0
        %992 = vmatprep.subr.mxu0 0.0
        %993 = vmatpush1.xpose.msra.mxu0 0.0
        %994 = vmatprep.subr.mxu0 0.0
        %995 = vmatpush1.xpose.msra.mxu0 0.0
        %996 = vmatprep.mubr.f32.mxu0 0.0
        %997 = vmatmul.mubr.f32.gmra.mrb[0].mxu0 %v921
        %v998 = vpop.f32.mrb[0].mxu0
        %v999 = vadd.f32 0.0, %v998
        %v1000 = vpop.f32.mrb[0].mxu0
        %1001 = vmatprep.mubr.f32.mxu0 0.0
        %1002 = vmatmul.mubr.f32.gmra.mrb[0].mxu0 %v924
        %v1003 = vpop.f32.mrb[0].mxu0
        %v1004 = vadd.f32 0.0, %v1003
        %v1005 = vpop.f32.mrb[0].mxu0
        %1006 = vdwg.mxu0
        %v1008 = vsel %vm832, %v538, 0
        %v1011 = vsel %vm832, %v674, 0
        %v1014 = vsel %vm832, %v828, 0
        %v1017 = vsel %vm832, %v829, 0
        %1019 = vmatprep.subr.mxu0 0.0
        %1020 = vmatpush1.xpose.msra.mxu0 %v1014
        %1021 = vmatprep.subr.mxu0 0.0
        %1022 = vmatpush1.xpose.msra.mxu0 %v1017
        %1023 = vmatprep.subr.mxu0 0.0
        %1024 = vmatpush1.xpose.msra.mxu0 0.0
        %1025 = vmatprep.subr.mxu0 0.0
        %1026 = vmatpush1.xpose.msra.mxu0 0.0
        %1027 = vmatprep.subr.mxu0 0.0
        %1028 = vmatpush1.xpose.msra.mxu0 0.0
        %1029 = vmatprep.subr.mxu0 0.0
        %1030 = vmatpush1.xpose.msra.mxu0 0.0
        %1031 = vmatprep.subr.mxu0 0.0
        %1032 = vmatpush1.xpose.msra.mxu0 0.0
        %1033 = vmatprep.subr.mxu0 0.0
        %1034 = vmatpush1.xpose.msra.mxu0 0.0
        %1035 = vmatprep.subr.mxu0 0.0
        %1036 = vmatpush1.xpose.msra.mxu0 0.0
        %1037 = vmatprep.subr.mxu0 0.0
        %1038 = vmatpush1.xpose.msra.mxu0 0.0
        %1039 = vmatprep.subr.mxu0 0.0
        %1040 = vmatpush1.xpose.msra.mxu0 0.0
        %1041 = vmatprep.subr.mxu0 0.0
        %1042 = vmatpush1.xpose.msra.mxu0 0.0
        %1043 = vmatprep.subr.mxu0 0.0
        %1044 = vmatpush1.xpose.msra.mxu0 0.0
        %1045 = vmatprep.subr.mxu0 0.0
        %1046 = vmatpush1.xpose.msra.mxu0 0.0
        %1047 = vmatprep.subr.mxu0 0.0
        %1048 = vmatpush1.xpose.msra.mxu0 0.0
        %1049 = vmatprep.subr.mxu0 0.0
        %1050 = vmatpush1.xpose.msra.mxu0 0.0
        %1051 = vmatprep.subr.mxu0 0.0
        %1052 = vmatpush1.xpose.msra.mxu0 0.0
        %1053 = vmatprep.subr.mxu0 0.0
        %1054 = vmatpush1.xpose.msra.mxu0 0.0
        %1055 = vmatprep.subr.mxu0 0.0
        %1056 = vmatpush1.xpose.msra.mxu0 0.0
        %1057 = vmatprep.subr.mxu0 0.0
        %1058 = vmatpush1.xpose.msra.mxu0 0.0
        %1059 = vmatprep.subr.mxu0 0.0
        %1060 = vmatpush1.xpose.msra.mxu0 0.0
        %1061 = vmatprep.subr.mxu0 0.0
        %1062 = vmatpush1.xpose.msra.mxu0 0.0
        %1063 = vmatprep.subr.mxu0 0.0
        %1064 = vmatpush1.xpose.msra.mxu0 0.0
        %1065 = vmatprep.subr.mxu0 0.0
        %1066 = vmatpush1.xpose.msra.mxu0 0.0
        %1067 = vmatprep.subr.mxu0 0.0
        %1068 = vmatpush1.xpose.msra.mxu0 0.0
        %1069 = vmatprep.subr.mxu0 0.0
        %1070 = vmatpush1.xpose.msra.mxu0 0.0
        %1071 = vmatprep.subr.mxu0 0.0
        %1072 = vmatpush1.xpose.msra.mxu0 0.0
        %1073 = vmatprep.subr.mxu0 0.0
        %1074 = vmatpush1.xpose.msra.mxu0 0.0
        %1075 = vmatprep.subr.mxu0 0.0
        %1076 = vmatpush1.xpose.msra.mxu0 0.0
        %1077 = vmatprep.subr.mxu0 0.0
        %1078 = vmatpush1.xpose.msra.mxu0 0.0
        %1079 = vmatprep.subr.mxu0 0.0
        %1080 = vmatpush1.xpose.msra.mxu0 0.0
        %1081 = vmatprep.subr.mxu0 0.0
        %1082 = vmatpush1.xpose.msra.mxu0 0.0
        %1083 = vmatprep.mubr.f32.mxu0 0.0
        %1084 = vmatmul.mubr.f32.gmra.mrb[0].mxu0 %v1008
        %v1085 = vpop.f32.mrb[0].mxu0
        %v1086 = vadd.f32 0.0, %v1085
        %v1087 = vpop.f32.mrb[0].mxu0
        %1088 = vmatprep.mubr.f32.mxu0 0.0
        %1089 = vmatmul.mubr.f32.gmra.mrb[0].mxu0 %v1011
        %v1090 = vpop.f32.mrb[0].mxu0
        %v1091 = vadd.f32 0.0, %v1090
        %v1092 = vpop.f32.mrb[0].mxu0
        %1093 = vdwg.mxu0
        %v1095 = vsel %vm832, %v539, 0
        %v1098 = vsel %vm832, %v675, 0
        %v1101 = vsel %vm832, %v830, 0
        %v1104 = vsel %vm832, %v831, 0
        %1106 = vmatprep.subr.mxu0 0.0
        %1107 = vmatpush1.xpose.msra.mxu0 %v1101
        %1108 = vmatprep.subr.mxu0 0.0
        %1109 = vmatpush1.xpose.msra.mxu0 %v1104
        %1110 = vmatprep.subr.mxu0 0.0
        %1111 = vmatpush1.xpose.msra.mxu0 0.0
        %1112 = vmatprep.subr.mxu0 0.0
        %1113 = vmatpush1.xpose.msra.mxu0 0.0
        %1114 = vmatprep.subr.mxu0 0.0
        %1115 = vmatpush1.xpose.msra.mxu0 0.0
        %1116 = vmatprep.subr.mxu0 0.0
        %1117 = vmatpush1.xpose.msra.mxu0 0.0
        %1118 = vmatprep.subr.mxu0 0.0
        %1119 = vmatpush1.xpose.msra.mxu0 0.0
        %1120 = vmatprep.subr.mxu0 0.0
        %1121 = vmatpush1.xpose.msra.mxu0 0.0
        %1122 = vmatprep.subr.mxu0 0.0
        %1123 = vmatpush1.xpose.msra.mxu0 0.0
        %1124 = vmatprep.subr.mxu0 0.0
        %1125 = vmatpush1.xpose.msra.mxu0 0.0
        %1126 = vmatprep.subr.mxu0 0.0
        %1127 = vmatpush1.xpose.msra.mxu0 0.0
        %1128 = vmatprep.subr.mxu0 0.0
        %1129 = vmatpush1.xpose.msra.mxu0 0.0
        %1130 = vmatprep.subr.mxu0 0.0
        %1131 = vmatpush1.xpose.msra.mxu0 0.0
        %1132 = vmatprep.subr.mxu0 0.0
        %1133 = vmatpush1.xpose.msra.mxu0 0.0
        %1134 = vmatprep.subr.mxu0 0.0
        %1135 = vmatpush1.xpose.msra.mxu0 0.0
        %1136 = vmatprep.subr.mxu0 0.0
        %1137 = vmatpush1.xpose.msra.mxu0 0.0
        %1138 = vmatprep.subr.mxu0 0.0
        %1139 = vmatpush1.xpose.msra.mxu0 0.0
        %1140 = vmatprep.subr.mxu0 0.0
        %1141 = vmatpush1.xpose.msra.mxu0 0.0
        %1142 = vmatprep.subr.mxu0 0.0
        %1143 = vmatpush1.xpose.msra.mxu0 0.0
        %1144 = vmatprep.subr.mxu0 0.0
        %1145 = vmatpush1.xpose.msra.mxu0 0.0
        %1146 = vmatprep.subr.mxu0 0.0
        %1147 = vmatpush1.xpose.msra.mxu0 0.0
        %1148 = vmatprep.subr.mxu0 0.0
        %1149 = vmatpush1.xpose.msra.mxu0 0.0
        %1150 = vmatprep.subr.mxu0 0.0
        %1151 = vmatpush1.xpose.msra.mxu0 0.0
        %1152 = vmatprep.subr.mxu0 0.0
        %1153 = vmatpush1.xpose.msra.mxu0 0.0
        %1154 = vmatprep.subr.mxu0 0.0
        %1155 = vmatpush1.xpose.msra.mxu0 0.0
        %1156 = vmatprep.subr.mxu0 0.0
        %1157 = vmatpush1.xpose.msra.mxu0 0.0
        %1158 = vmatprep.subr.mxu0 0.0
        %1159 = vmatpush1.xpose.msra.mxu0 0.0
        %1160 = vmatprep.subr.mxu0 0.0
        %1161 = vmatpush1.xpose.msra.mxu0 0.0
        %1162 = vmatprep.subr.mxu0 0.0
        %1163 = vmatpush1.xpose.msra.mxu0 0.0
        %1164 = vmatprep.subr.mxu0 0.0
        %1165 = vmatpush1.xpose.msra.mxu0 0.0
        %1166 = vmatprep.subr.mxu0 0.0
        %1167 = vmatpush1.xpose.msra.mxu0 0.0
        %1168 = vmatprep.subr.mxu0 0.0
        %1169 = vmatpush1.xpose.msra.mxu0 0.0
        %1170 = vmatprep.mubr.f32.mxu0 0.0
        %1171 = vmatmul.mubr.f32.gmra.mrb[0].mxu0 %v1095
        %v1172 = vpop.f32.mrb[0].mxu0
        %v1173 = vadd.f32 0.0, %v1172
        %v1174 = vpop.f32.mrb[0].mxu0
        %1175 = vmatprep.mubr.f32.mxu0 0.0
        %1176 = vmatmul.mubr.f32.gmra.mrb[0].mxu0 %v1098
        %v1177 = vpop.f32.mrb[0].mxu0
        %v1178 = vadd.f32 0.0, %v1177
        %v1179 = vpop.f32.mrb[0].mxu0
        %1180 = vdwg.mxu0
        %v1181 = vcombine.low %v912, %v1086
        %v1182 = vcombine.high %v912, %v1086
        %v1184 = vunpack.c.l.s4 1983009808
        %v1185 = vunpack.c.0.s8 %v1184
        %v1186 = vlaneseq
        %v1187 = vshrl.u32 %v1186, 7
        %v1188 = vsub.s32 %v1185, %v1187
        %v1189 = vrot.slane %v1181, %v1188
        %v1191 = vunpack.c.l.s4 1983009808
        %v1192 = vunpack.c.0.s8 %v1191
        %v1193 = vlaneseq
        %v1194 = vshrl.u32 %v1193, 7
        %v1195 = vsub.s32 %v1192, %v1194
        %v1196 = vrot.slane %v1182, %v1195
        %v1197 = vcombine.low %v999, %v1173
        %v1198 = vcombine.high %v999, %v1173
        %v1200 = vunpack.c.l.s4 1983009808
        %v1201 = vunpack.c.0.s8 %v1200
        %v1202 = vlaneseq
        %v1203 = vshrl.u32 %v1202, 7
        %v1204 = vsub.s32 %v1201, %v1203
        %v1205 = vrot.slane %v1197, %v1204
        %v1207 = vunpack.c.l.s4 1983009808
        %v1208 = vunpack.c.0.s8 %v1207
        %v1209 = vlaneseq
        %v1210 = vshrl.u32 %v1209, 7
        %v1211 = vsub.s32 %v1208, %v1210
        %v1212 = vrot.slane %v1198, %v1211
        %v1213 = vcombine.low %v1189, %v1205
        %v1214 = vcombine.high %v1189, %v1205
        %v1216 = vunpack.c.l.s4 1934713408
        %v1217 = vunpack.c.0.s8 %v1216
        %v1218 = vlaneseq
        %v1219 = vshrl.u32 %v1218, 7
        %v1220 = vsub.s32 %v1217, %v1219
        %v1221 = vrot.slane %v1213, %v1220
        %v1223 = vunpack.c.l.s4 1934713408
        %v1224 = vunpack.c.0.s8 %v1223
        %v1225 = vlaneseq
        %v1226 = vshrl.u32 %v1225, 7
        %v1227 = vsub.s32 %v1224, %v1226
        %v1228 = vrot.slane %v1214, %v1227
        %v1229 = vcombine.low %v1196, %v1212
        %v1230 = vcombine.high %v1196, %v1212
        %v1232 = vunpack.c.l.s4 1934713408
        %v1233 = vunpack.c.0.s8 %v1232
        %v1234 = vlaneseq
        %v1235 = vshrl.u32 %v1234, 7
        %v1236 = vsub.s32 %v1233, %v1235
        %v1237 = vrot.slane %v1229, %v1236
        %v1239 = vunpack.c.l.s4 1934713408
        %v1240 = vunpack.c.0.s8 %v1239
        %v1241 = vlaneseq
        %v1242 = vshrl.u32 %v1241, 7
        %v1243 = vsub.s32 %v1240, %v1242
        %v1244 = vrot.slane %v1230, %v1243
        %v1245 = vcombine.high %v1221, 0.0
        %v1246 = vcombine.high %v1228, 0.0
        %v1247 = vcombine.high %v1237, 0.0
        %v1248 = vcombine.high %v1244, 0.0
        %v1249 = vcombine.low %v917, %v1091
        %v1250 = vcombine.high %v917, %v1091
        %v1252 = vunpack.c.l.s4 1983009808
        %v1253 = vunpack.c.0.s8 %v1252
        %v1254 = vlaneseq
        %v1255 = vshrl.u32 %v1254, 7
        %v1256 = vsub.s32 %v1253, %v1255
        %v1257 = vrot.slane %v1249, %v1256
        %v1259 = vunpack.c.l.s4 1983009808
        %v1260 = vunpack.c.0.s8 %v1259
        %v1261 = vlaneseq
        %v1262 = vshrl.u32 %v1261, 7
        %v1263 = vsub.s32 %v1260, %v1262
        %v1264 = vrot.slane %v1250, %v1263
        %v1265 = vcombine.low %v1004, %v1178
        %v1266 = vcombine.high %v1004, %v1178
        %v1268 = vunpack.c.l.s4 1983009808
        %v1269 = vunpack.c.0.s8 %v1268
        %v1270 = vlaneseq
        %v1271 = vshrl.u32 %v1270, 7
        %v1272 = vsub.s32 %v1269, %v1271
        %v1273 = vrot.slane %v1265, %v1272
        %v1275 = vunpack.c.l.s4 1983009808
        %v1276 = vunpack.c.0.s8 %v1275
        %v1277 = vlaneseq
        %v1278 = vshrl.u32 %v1277, 7
        %v1279 = vsub.s32 %v1276, %v1278
        %v1280 = vrot.slane %v1266, %v1279
        %v1281 = vcombine.low %v1257, %v1273
        %v1282 = vcombine.high %v1257, %v1273
        %v1284 = vunpack.c.l.s4 1934713408
        %v1285 = vunpack.c.0.s8 %v1284
        %v1286 = vlaneseq
        %v1287 = vshrl.u32 %v1286, 7
        %v1288 = vsub.s32 %v1285, %v1287
        %v1289 = vrot.slane %v1281, %v1288
        %v1291 = vunpack.c.l.s4 1934713408
        %v1292 = vunpack.c.0.s8 %v1291
        %v1293 = vlaneseq
        %v1294 = vshrl.u32 %v1293, 7
        %v1295 = vsub.s32 %v1292, %v1294
        %v1296 = vrot.slane %v1282, %v1295
        %v1297 = vcombine.low %v1264, %v1280
        %v1298 = vcombine.high %v1264, %v1280
        %v1300 = vunpack.c.l.s4 1934713408
        %v1301 = vunpack.c.0.s8 %v1300
        %v1302 = vlaneseq
        %v1303 = vshrl.u32 %v1302, 7
        %v1304 = vsub.s32 %v1301, %v1303
        %v1305 = vrot.slane %v1297, %v1304
        %v1307 = vunpack.c.l.s4 1934713408
        %v1308 = vunpack.c.0.s8 %v1307
        %v1309 = vlaneseq
        %v1310 = vshrl.u32 %v1309, 7
        %v1311 = vsub.s32 %v1308, %v1310
        %v1312 = vrot.slane %v1298, %v1311
        %v1313 = vcombine.high %v1289, 0.0
        %v1314 = vcombine.high %v1296, 0.0
        %v1315 = vcombine.high %v1305, 0.0
        %v1316 = vcombine.high %v1312, 0.0
        %1318 = vrot.lane.b32.xlu0 %v1245, 16
        %v1319 = vpop.permute.xlu0 %1318
        %1322 = vrot.lane.b32.xlu0 %v1228, 32
        %v1323 = vpop.permute.xlu0 %1322
        %1326 = vrot.lane.b32.xlu0 %v1246, 48
        %v1327 = vpop.permute.xlu0 %1326
        %1330 = vrot.lane.b32.xlu0 %v1237, 64
        %v1331 = vpop.permute.xlu0 %1330
        %1334 = vrot.lane.b32.xlu0 %v1247, 80
        %v1335 = vpop.permute.xlu0 %1334
        %1338 = vrot.lane.b32.xlu0 %v1244, 96
        %v1339 = vpop.permute.xlu0 %1338
        %1342 = vrot.lane.b32.xlu0 %v1248, 112
        %v1343 = vpop.permute.xlu0 %1342
        %1346 = vrot.lane.b32.xlu0 %v1313, 16
        %v1347 = vpop.permute.xlu0 %1346
        %1350 = vrot.lane.b32.xlu0 %v1296, 32
        %v1351 = vpop.permute.xlu0 %1350
        %1354 = vrot.lane.b32.xlu0 %v1314, 48
        %v1355 = vpop.permute.xlu0 %1354
        %1358 = vrot.lane.b32.xlu0 %v1305, 64
        %v1359 = vpop.permute.xlu0 %1358
        %1362 = vrot.lane.b32.xlu0 %v1315, 80
        %v1363 = vpop.permute.xlu0 %1362
        %1366 = vrot.lane.b32.xlu0 %v1312, 96
        %v1367 = vpop.permute.xlu0 %1366
        %1370 = vrot.lane.b32.xlu0 %v1316, 112
        %v1371 = vpop.permute.xlu0 %1370
        %v1373 = vsel %vm832, %v1221, %v1319
        %vm1374 = vcmask 261120
        %v1375 = vsel %vm1374, %v1373, %v1323
        %vm1376 = vcmask 392192
        %v1377 = vsel %vm1376, %v1375, %v1327
        %vm1378 = vcmask 523264
        %v1379 = vsel %vm1378, %v1377, %v1331
        %vm1380 = vcmask 654336
        %v1381 = vsel %vm1380, %v1379, %v1335
        %vm1382 = vcmask 785408
        %v1383 = vsel %vm1382, %v1381, %v1339
        %vm1384 = vcmask 916480
        %v1385 = vsel %vm1384, %v1383, %v1343
        %v1386 = vsel %vm832, %v1289, %v1347
        %v1387 = vsel %vm1374, %v1386, %v1351
        %v1388 = vsel %vm1376, %v1387, %v1355
        %v1389 = vsel %vm1378, %v1388, %v1359
        %v1390 = vsel %vm1380, %v1389, %v1363
        %v1391 = vsel %vm1382, %v1390, %v1367
        %v1392 = vsel %vm1384, %v1391, %v1371
        %v1393 = vsel %vm238, %v1385, -inf
        %v1394 = vsel %vm238, %v1392, -inf
        %v1395 = vmax.f32 %v1393, %v1394
        %1396 = vmax.xlane.f32.xlu0 %v1395
        %v1397 = vpop.xlane.xlu0 %1396
        %v1398 = vsub.f32 %v1385, %v1397
        %v1399 = vsub.f32 %v1392, %v1397
        %v1400 = vmul.f32 %v1398, 1.442695
        %v1401 = vpow.pop %v1400
        %v1402 = vmul.f32 %v1399, 1.442695
        %v1403 = vpow.pop %v1402
        %v1404 = vsel %vm238, %v1401, 0.0
        %v1405 = vsel %vm238, %v1403, 0.0
        %v1406 = vadd.f32 %v1404, %v1405
        %1407 = vadd.xlane.f32.xlu0 %v1406
        %v1408 = vpop.xlane.xlu0 %1407
        %v1409 = vrcp.pop %v1408
        %v1410 = vmul.f32 %v1401, %v1409
        %v1411 = vmul.f32 %v1403, %v1409
        %v1412 = vcombine.low %v744, %v746
        %v1413 = vcombine.high %v744, %v746
        %v1415 = vunpack.c.l.s4 1983009808
        %v1416 = vunpack.c.0.s8 %v1415
        %v1417 = vlaneseq
        %v1418 = vshrl.u32 %v1417, 7
        %v1419 = vsub.s32 %v1416, %v1418
        %v1420 = vrot.slane %v1412, %v1419
        %v1422 = vunpack.c.l.s4 1983009808
        %v1423 = vunpack.c.0.s8 %v1422
        %v1424 = vlaneseq
        %v1425 = vshrl.u32 %v1424, 7
        %v1426 = vsub.s32 %v1423, %v1425
        %v1427 = vrot.slane %v1413, %v1426
        %v1428 = vcombine.low %v745, %v747
        %v1429 = vcombine.high %v745, %v747
        %v1431 = vunpack.c.l.s4 1983009808
        %v1432 = vunpack.c.0.s8 %v1431
        %v1433 = vlaneseq
        %v1434 = vshrl.u32 %v1433, 7
        %v1435 = vsub.s32 %v1432, %v1434
        %v1436 = vrot.slane %v1428, %v1435
        %v1438 = vunpack.c.l.s4 1983009808
        %v1439 = vunpack.c.0.s8 %v1438
        %v1440 = vlaneseq
        %v1441 = vshrl.u32 %v1440, 7
        %v1442 = vsub.s32 %v1439, %v1441
        %v1443 = vrot.slane %v1429, %v1442
        %v1444 = vcombine.low %v1420, %v1436
        %v1445 = vcombine.high %v1420, %v1436
        %v1447 = vunpack.c.l.s4 1934713408
        %v1448 = vunpack.c.0.s8 %v1447
        %v1449 = vlaneseq
        %v1450 = vshrl.u32 %v1449, 7
        %v1451 = vsub.s32 %v1448, %v1450
        %v1452 = vrot.slane %v1444, %v1451
        %v1454 = vunpack.c.l.s4 1934713408
        %v1455 = vunpack.c.0.s8 %v1454
        %v1456 = vlaneseq
        %v1457 = vshrl.u32 %v1456, 7
        %v1458 = vsub.s32 %v1455, %v1457
        %v1459 = vrot.slane %v1445, %v1458
        %v1460 = vcombine.low %v1427, %v1443
        %v1461 = vcombine.high %v1427, %v1443
        %v1463 = vunpack.c.l.s4 1934713408
        %v1464 = vunpack.c.0.s8 %v1463
        %v1465 = vlaneseq
        %v1466 = vshrl.u32 %v1465, 7
        %v1467 = vsub.s32 %v1464, %v1466
        %v1468 = vrot.slane %v1460, %v1467
        %v1470 = vunpack.c.l.s4 1934713408
        %v1471 = vunpack.c.0.s8 %v1470
        %v1472 = vlaneseq
        %v1473 = vshrl.u32 %v1472, 7
        %v1474 = vsub.s32 %v1471, %v1473
        %v1475 = vrot.slane %v1461, %v1474
        %v1476 = vcombine.high %v1452, 0.0
        %v1477 = vcombine.high %v1459, 0.0
        %v1478 = vcombine.high %v1468, 0.0
        %v1479 = vcombine.high %v1475, 0.0
        %v1480 = vcombine.low %v812, %v814
        %v1481 = vcombine.high %v812, %v814
        %v1483 = vunpack.c.l.s4 1983009808
        %v1484 = vunpack.c.0.s8 %v1483
        %v1485 = vlaneseq
        %v1486 = vshrl.u32 %v1485, 7
        %v1487 = vsub.s32 %v1484, %v1486
        %v1488 = vrot.slane %v1480, %v1487
        %v1490 = vunpack.c.l.s4 1983009808
        %v1491 = vunpack.c.0.s8 %v1490
        %v1492 = vlaneseq
        %v1493 = vshrl.u32 %v1492, 7
        %v1494 = vsub.s32 %v1491, %v1493
        %v1495 = vrot.slane %v1481, %v1494
        %v1496 = vcombine.low %v813, %v815
        %v1497 = vcombine.high %v813, %v815
        %v1499 = vunpack.c.l.s4 1983009808
        %v1500 = vunpack.c.0.s8 %v1499
        %v1501 = vlaneseq
        %v1502 = vshrl.u32 %v1501, 7
        %v1503 = vsub.s32 %v1500, %v1502
        %v1504 = vrot.slane %v1496, %v1503
        %v1506 = vunpack.c.l.s4 1983009808
        %v1507 = vunpack.c.0.s8 %v1506
        %v1508 = vlaneseq
        %v1509 = vshrl.u32 %v1508, 7
        %v1510 = vsub.s32 %v1507, %v1509
        %v1511 = vrot.slane %v1497, %v1510
        %v1512 = vcombine.low %v1488, %v1504
        %v1513 = vcombine.high %v1488, %v1504
        %v1515 = vunpack.c.l.s4 1934713408
        %v1516 = vunpack.c.0.s8 %v1515
        %v1517 = vlaneseq
        %v1518 = vshrl.u32 %v1517, 7
        %v1519 = vsub.s32 %v1516, %v1518
        %v1520 = vrot.slane %v1512, %v1519
        %v1522 = vunpack.c.l.s4 1934713408
        %v1523 = vunpack.c.0.s8 %v1522
        %v1524 = vlaneseq
        %v1525 = vshrl.u32 %v1524, 7
        %v1526 = vsub.s32 %v1523, %v1525
        %v1527 = vrot.slane %v1513, %v1526
        %v1528 = vcombine.low %v1495, %v1511
        %v1529 = vcombine.high %v1495, %v1511
        %v1531 = vunpack.c.l.s4 1934713408
        %v1532 = vunpack.c.0.s8 %v1531
        %v1533 = vlaneseq
        %v1534 = vshrl.u32 %v1533, 7
        %v1535 = vsub.s32 %v1532, %v1534
        %v1536 = vrot.slane %v1528, %v1535
        %v1538 = vunpack.c.l.s4 1934713408
        %v1539 = vunpack.c.0.s8 %v1538
        %v1540 = vlaneseq
        %v1541 = vshrl.u32 %v1540, 7
        %v1542 = vsub.s32 %v1539, %v1541
        %v1543 = vrot.slane %v1529, %v1542
        %v1544 = vcombine.high %v1520, 0.0
        %v1545 = vcombine.high %v1527, 0.0
        %v1546 = vcombine.high %v1536, 0.0
        %v1547 = vcombine.high %v1543, 0.0
        %1549 = vrot.lane.b32.xlu0 %v1476, 16
        %v1550 = vpop.permute.xlu0 %1549
        %1553 = vrot.lane.b32.xlu0 %v1459, 32
        %v1554 = vpop.permute.xlu0 %1553
        %1557 = vrot.lane.b32.xlu0 %v1477, 48
        %v1558 = vpop.permute.xlu0 %1557
        %1561 = vrot.lane.b32.xlu0 %v1468, 64
        %v1562 = vpop.permute.xlu0 %1561
        %1565 = vrot.lane.b32.xlu0 %v1478, 80
        %v1566 = vpop.permute.xlu0 %1565
        %1569 = vrot.lane.b32.xlu0 %v1475, 96
        %v1570 = vpop.permute.xlu0 %1569
        %1573 = vrot.lane.b32.xlu0 %v1479, 112
        %v1574 = vpop.permute.xlu0 %1573
        %1577 = vrot.lane.b32.xlu0 %v1544, 16
        %v1578 = vpop.permute.xlu0 %1577
        %1581 = vrot.lane.b32.xlu0 %v1527, 32
        %v1582 = vpop.permute.xlu0 %1581
        %1585 = vrot.lane.b32.xlu0 %v1545, 48
        %v1586 = vpop.permute.xlu0 %1585
        %1589 = vrot.lane.b32.xlu0 %v1536, 64
        %v1590 = vpop.permute.xlu0 %1589
        %1593 = vrot.lane.b32.xlu0 %v1546, 80
        %v1594 = vpop.permute.xlu0 %1593
        %1597 = vrot.lane.b32.xlu0 %v1543, 96
        %v1598 = vpop.permute.xlu0 %1597
        %1601 = vrot.lane.b32.xlu0 %v1547, 112
        %v1602 = vpop.permute.xlu0 %1601
        %v1604 = vsel %vm832, %v1452, %v1550
        %v1605 = vsel %vm1374, %v1604, %v1554
        %v1606 = vsel %vm1376, %v1605, %v1558
        %v1607 = vsel %vm1378, %v1606, %v1562
        %v1608 = vsel %vm1380, %v1607, %v1566
        %v1609 = vsel %vm1382, %v1608, %v1570
        %v1610 = vsel %vm1384, %v1609, %v1574
        %v1611 = vsel %vm832, %v1520, %v1578
        %v1612 = vsel %vm1374, %v1611, %v1582
        %v1613 = vsel %vm1376, %v1612, %v1586
        %v1614 = vsel %vm1378, %v1613, %v1590
        %v1615 = vsel %vm1380, %v1614, %v1594
        %v1616 = vsel %vm1382, %v1615, %v1598
        %v1617 = vsel %vm1384, %v1616, %v1602
        %v1618 = vmul.f32 %v1410, %v1610
        %v1619 = vmul.f32 %v1411, %v1617
        %v1622 = vcombine.low %v1618, %v1619
        %1624 = vst [vmem:[%s206] sm:$0xff] %v1622
        %s1625 = sand.u32 %s116, 1
        %s1626 = scalar_lea.sflag [#allocation4], %s1625
        %s1627 = sand.u32 %s116, 1
        %s1628 = smul.addr %s1627, 8
        %s1629 = scalar_lea.vmem [#allocation5], %s1628
        // Predicated region
        $region41: #{tpu_custom_call.1} parent=35 // pred_check
          %p1630 = pneg %p126
        $region42: #{tpu_custom_call.1} parent=35 // pred_check_branch
          %1632 = sbr.rel (%p1630) target = $region44
        $region43: #{tpu_custom_call.1} parent=35 // pred_region
          %s1633 = smul.u32 2, %s19
          %s1635 = ssub.s32 128, 128
          %1636 = vsyncadd %s1626, %s1635
          %s1637 = smul.addr %s1633, 64
          %s1638 = scalar_lea.hbm %s4, %s1637
          %s1640 = sshll.u32 %s1629, 4
          %s1641 = int_to_ptr.vmem [resolvable:$true] %s1640
          %1643 = dma.vmem_to_hbm [thread:$0]  %s1641, 128, %s1638, %s1626
        $region44: #{tpu_custom_call.1} parent=35 // pred_fallthru
          _
      $region36: #{tpu_custom_call.1} parent=5 // pred_fallthru
        _
      %p1644 = scmp.le.s32.totalorder 2, %s14
      // Predicated region
      $region45: #{tpu_custom_call.1} parent=5 // pred_check
        %p1645 = pneg %p1644
      $region46: #{tpu_custom_call.1} parent=5 // pred_check_branch
        %1647 = sbr.rel (%p1645) target = $region48
      $region47: #{tpu_custom_call.1} parent=5 // pred_region
        %s1648 = ssub.s32 %s14, 2
        // Predicated region
        $region49: #{tpu_custom_call.1} parent=47 // pred_check
          %p1649 = pneg %p132
        $region50: #{tpu_custom_call.1} parent=47 // pred_check_branch
          %1651 = sbr.rel (%p1649) target = $region52
        $region51: #{tpu_custom_call.1} parent=47 // pred_region
          %s1652 = sand.u32 %s117, 1
          %s1653 = scalar_lea.sflag [#allocation4], %s1652
          %s1654 = sand.u32 %s117, 1
          %s1655 = smul.addr %s1654, 8
          %s1656 = scalar_lea.vmem [#allocation5], %s1655
          %1657 = dma.done %s1653, 128
        $region52: #{tpu_custom_call.1} parent=47 // pred_fallthru
          _
      $region48: #{tpu_custom_call.1} parent=5 // pred_fallthru
        _
    $region6: #{tpu_custom_call.1} parent=1 // loop_footer
      %s18 = sadd.s32 1, %s14
    $region7: #{tpu_custom_call.1} parent=1 // loop_footer_branch
      %13 = sbr.rel target = $region3
    $region8: #{tpu_custom_call.1} parent=1 // loop_exit
      _
    %1658 = vsyncpa [#allocation3], 1
    %s1659 = scalar_lea.sflag [#allocation3], 1
    %1660 = vsyncpa %s1659, 1
    %1661 = vsyncpa [#allocation4], 1
    %s1662 = scalar_lea.sflag [#allocation4], 1
    %1663 = vsyncpa %s1662, 1

// kernel: tpu_custom_call.1
$region0: #{tpu_custom_call.1}
  #allocation0 [shape = 'u32[]', space=smem, size = 0x4, offset = 0x4, fixed_abs, tag = 'smem constant byte address 0x4 - core index']
  #allocation1 [shape = 'u32[144,128]{1,0:T(1,128)}', space=vmem, size = 0x12000, scoped, tag = 'internal scratch']
  %s0 = inlined_call_operand.vmem [shape: f32[4,512], index: 0, kind: input, shape index: {}]
  %s1 = inlined_call_operand.vmem [shape: f32[12,4], index: 1, kind: input, shape index: {}]
  %s2 = inlined_call_operand.vmem [shape: f32[12,1], index: 2, kind: input, shape index: {}]
  %s3 = inlined_call_operand.hbm [shape: f32[4,16,16], index: 3, kind: input, shape index: {}]
  %s4 = inlined_call_operand.hbm [shape: f32[4,512], index: 4, kind: output, shape index: {}]
  %s5 = sld [smem:[#allocation0]]
  $region53: #{tpu_custom_call.1} parent=0
    _
  %s7 = ssub.s32 1, %s5
  %s8 = scalar_select 0, %s7, %s5
  $region1: #{tpu_custom_call.1} parent=0
    #allocation2 [shape = 'u8[32768]{0}', space=vmem, size = 0x8000, scoped, tag = 'input window, operand 3, single buffered']
    #allocation3 [shape = 's32[2]{0}', space=sflag, size = 0x8, scoped, tag = 'scoped memory for tpu_custom_call.1']
    #allocation4 [shape = 's32[2]{0}', space=sflag, size = 0x8, scoped, tag = 'scoped memory for tpu_custom_call.1']
    #allocation5 [shape = 'u8[8192]{0}', space=vmem, size = 0x2000, scoped, tag = 'output window, operand 0']
    %9 = vsyncpa [#allocation3], 0
    %10 = vsyncpa [#allocation4], 0
    %s11 = scalar_lea.sflag [#allocation4], 1
    %12 = vsyncpa %s11, 0
    loop: start=0, step=1, limit=4
    $region2: #{tpu_custom_call.1} parent=1 // loop_pre_header
      _
    $region3: #{tpu_custom_call.1} parent=1 // loop_header
      %s14 = sphi 0, %s18
      %p15 = scmp.ge.s32.totalorder %s14, 4
      %s24 = sphi 0, %s26
      %s27 = sphi 0, %s24
      %s28 = sphi 0, %s27
      %s44 = sphi 0, %s28
      %s48 = sphi 0, %s48
      %s50 = sphi 0, %s48
      %s51 = sphi 0, %s50
      %s65 = sphi 0, %s51
      %s69 = sphi 0, %s69
      %s71 = sphi 0, %s69
      %s72 = sphi 0, %s71
      %s86 = sphi 0, %s72
      %s90 = sphi 0, %s90
      %s92 = sphi 0, %s90
      %s93 = sphi 0, %s92
      %s107 = sphi 0, %s93
      %s113 = sphi 0, %s115
      %s116 = sphi 0, %s113
      %s117 = sphi 0, %s116
      %s133 = sphi 0, %s117
    $region4: #{tpu_custom_call.1} parent=1 // loop_header_branch
      %17 = sbr.rel (%p15) target = $region8
    $region5: #{tpu_custom_call.1} parent=1 // loop_body
      %s19 = ssub.s32 %s14, 1
      %s20 = ssub.s32 %s14, 2
      %s21 = sadd.s32 %s14, 1
      %s22 = ssub.s32 %s14, %s21
      %p23 = scmp.eq.s32.totalorder %s22, 0
      %s25 = sadd.s32 %s24, 1
      %s26 = scalar_select %p23, %s24, %s25
      %p29 = pneg %p23
      %p30 = scmp.eq.s32.totalorder %s14, 1
      %p31 = por %p29, %p30
      %p32 = scmp.ne.s32.totalorder %s24, %s27
      %p33 = scmp.eq.s32.totalorder %s14, 0
      %p34 = por %p32, %p33
      %p35 = scmp.ne.s32.totalorder %s24, %s27
      %p36 = scmp.eq.s32.totalorder %s19, 1
      %p37 = por %p35, %p36
      %p38 = scmp.ne.s32.totalorder %s27, %s28
      %p39 = scmp.eq.s32.totalorder %s19, 0
      %p40 = por %p38, %p39
      %p41 = scmp.ne.s32.totalorder %s27, %s28
      %p42 = scmp.eq.s32.totalorder %s20, 1
      %p43 = por %p41, %p42
      %p45 = scmp.ne.s32.totalorder %s28, %s44
      %p46 = scmp.eq.s32.totalorder %s20, 0
      %p47 = por %p45, %p46
      %s49 = sadd.s32 %s48, 1
      %p52 = scmp.eq.s32.totalorder %s14, 1
      %p53 = scmp.ne.s32.totalorder %s48, %s50
      %p54 = scmp.eq.s32.totalorder %s14, 0
      %p55 = por %p53, %p54
      %p56 = scmp.ne.s32.totalorder %s48, %s50
      %p57 = scmp.eq.s32.totalorder %s19, 1
      %p58 = por %p56, %p57
      %p59 = scmp.ne.s32.totalorder %s50, %s51
      %p60 = scmp.eq.s32.totalorder %s19, 0
      %p61 = por %p59, %p60
      %p62 = scmp.ne.s32.totalorder %s50, %s51
      %p63 = scmp.eq.s32.totalorder %s20, 1
      %p64 = por %p62, %p63
      %p66 = scmp.ne.s32.totalorder %s51, %s65
      %p67 = scmp.eq.s32.totalorder %s20, 0
      %p68 = por %p66, %p67
      %s70 = sadd.s32 %s69, 1
      %p73 = scmp.eq.s32.totalorder %s14, 1
      %p74 = scmp.ne.s32.totalorder %s69, %s71
      %p75 = scmp.eq.s32.totalorder %s14, 0
      %p76 = por %p74, %p75
      %p77 = scmp.ne.s32.totalorder %s69, %s71
      %p78 = scmp.eq.s32.totalorder %s19, 1
      %p79 = por %p77, %p78
      %p80 = scmp.ne.s32.totalorder %s71, %s72
      %p81 = scmp.eq.s32.totalorder %s19, 0
      %p82 = por %p80, %p81
      %p83 = scmp.ne.s32.totalorder %s71, %s72
      %p84 = scmp.eq.s32.totalorder %s20, 1
      %p85 = por %p83, %p84
      %p87 = scmp.ne.s32.totalorder %s72, %s86
      %p88 = scmp.eq.s32.totalorder %s20, 0
      %p89 = por %p87, %p88
      %s91 = sadd.s32 %s90, 1
      %p94 = scmp.eq.s32.totalorder %s14, 1
      %p95 = scmp.ne.s32.totalorder %s90, %s92
      %p96 = scmp.eq.s32.totalorder %s14, 0
      %p97 = por %p95, %p96
      %p98 = scmp.ne.s32.totalorder %s90, %s92
      %p99 = scmp.eq.s32.totalorder %s19, 1
      %p100 = por %p98, %p99
      %p101 = scmp.ne.s32.totalorder %s92, %s93
      %p102 = scmp.eq.s32.totalorder %s19, 0
      %p103 = por %p101, %p102
      %p104 = scmp.ne.s32.totalorder %s92, %s93
      %p105 = scmp.eq.s32.totalorder %s20, 1
      %p106 = por %p104, %p105
      %p108 = scmp.ne.s32.totalorder %s93, %s107
      %p109 = scmp.eq.s32.totalorder %s20, 0
      %p110 = por %p108, %p109
      %s111 = ssub.s32 %s14, %s21
      %p112 = scmp.eq.s32.totalorder %s111, 0
      %s114 = sadd.s32 %s113, 1
      %s115 = scalar_select %p112, %s113, %s114
      %p118 = pneg %p112
      %p119 = scmp.eq.s32.totalorder %s14, 1
      %p120 = por %p118, %p119
      %p121 = scmp.ne.s32.totalorder %s113, %s116
      %p122 = scmp.eq.s32.totalorder %s14, 0
      %p123 = por %p121, %p122
      %p124 = scmp.ne.s32.totalorder %s113, %s116
      %p125 = scmp.eq.s32.totalorder %s19, 1
      %p126 = por %p124, %p125
      %p127 = scmp.ne.s32.totalorder %s116, %s117
      %p128 = scmp.eq.s32.totalorder %s19, 0
      %p129 = por %p127, %p128
      %p130 = scmp.ne.s32.totalorder %s116, %s117
      %p131 = scmp.eq.s32.totalorder %s20, 1
      %p132 = por %p130, %p131
      %p134 = scmp.ne.s32.totalorder %s117, %s133
      %p135 = scmp.eq.s32.totalorder %s20, 0
      %p136 = por %p134, %p135
      %p137 = scmp.le.s32.totalorder 1, %s14
      %p138 = scmp.lt.s32.totalorder %s14, 3
      %p139 = pnand %p137, %p138
      %p140 = pneg %p139
      // Predicated region
      $region9: #{tpu_custom_call.1} parent=5 // pred_check
        _
      $region10: #{tpu_custom_call.1} parent=5 // pred_check_branch
        %142 = sbr.rel (%p139) target = $region12
      $region11: #{tpu_custom_call.1} parent=5 // pred_region
        %s143 = ssub.s32 %s14, 1
        // Predicated region
        $region13: #{tpu_custom_call.1} parent=11 // pred_check
          %p144 = pneg %p61
        $region14: #{tpu_custom_call.1} parent=11 // pred_check_branch
          %146 = sbr.rel (%p144) target = $region16
        $region15: #{tpu_custom_call.1} parent=11 // pred_region
          _
        $region16: #{tpu_custom_call.1} parent=11 // pred_fallthru
          _
        // Predicated region
        $region17: #{tpu_custom_call.1} parent=11 // pred_check
          %p147 = pneg %p82
        $region18: #{tpu_custom_call.1} parent=11 // pred_check_branch
          %149 = sbr.rel (%p147) target = $region20
        $region19: #{tpu_custom_call.1} parent=11 // pred_region
          _
        $region20: #{tpu_custom_call.1} parent=11 // pred_fallthru
          _
        // Predicated region
        $region21: #{tpu_custom_call.1} parent=11 // pred_check
          %p150 = pneg %p103
        $region22: #{tpu_custom_call.1} parent=11 // pred_check_branch
          %152 = sbr.rel (%p150) target = $region24
        $region23: #{tpu_custom_call.1} parent=11 // pred_region
          %s154 = ssub.s32 1024, 1024
          %155 = vsyncadd [#allocation3], %s154
          %s156 = sshll.u32 [#allocation2], 4
          %s157 = int_to_ptr.vmem [resolvable:$true] %s156
          %162 = dma.hbm_to_vmem [thread:$0]  %s3, 1024, %s157, [#allocation3], 128, 128, 8
        $region24: #{tpu_custom_call.1} parent=11 // pred_fallthru
          _
      $region12: #{tpu_custom_call.1} parent=5 // pred_fallthru
        _
      %p163 = scmp.lt.s32.totalorder %s14, 2
      // Predicated region
      $region25: #{tpu_custom_call.1} parent=5 // pred_check
        %p164 = pneg %p163
      $region26: #{tpu_custom_call.1} parent=5 // pred_check_branch
        %166 = sbr.rel (%p164) target = $region28
      $region27: #{tpu_custom_call.1} parent=5 // pred_region
        // Predicated region
        $region29: #{tpu_custom_call.1} parent=27 // pred_check
          %p167 = pneg %p34
        $region30: #{tpu_custom_call.1} parent=27 // pred_check_branch
          %169 = sbr.rel (%p167) target = $region32
        $region31: #{tpu_custom_call.1} parent=27 // pred_region
          %s170 = smul.u32 2, %s14
          %p171 = scmp.lt.s32.totalorder %s170, 3
          %s172 = scalar_select %p171, %s170, 3
          %s173 = smul.addr %s172, 4
          %s174 = scalar_lea.vmem %s0, %s173
          %s175 = smul.u32 2, %s14
        $region32: #{tpu_custom_call.1} parent=27 // pred_fallthru
          _
      $region28: #{tpu_custom_call.1} parent=5 // pred_fallthru
        _
      %p176 = scmp.le.s32.totalorder 1, %s14
      %p177 = scmp.lt.s32.totalorder %s14, 3
      %p178 = pnand %p176, %p177
      %p179 = pneg %p178
      // Predicated region
      $region33: #{tpu_custom_call.1} parent=5 // pred_check
        _
      $region34: #{tpu_custom_call.1} parent=5 // pred_check_branch
        %181 = sbr.rel (%p178) target = $region36
      $region35: #{tpu_custom_call.1} parent=5 // pred_region
        %s182 = ssub.s32 %s14, 1
        // Predicated region
        $region37: #{tpu_custom_call.1} parent=35 // pred_check
          %p183 = pneg %p103
        $region38: #{tpu_custom_call.1} parent=35 // pred_check_branch
          %185 = sbr.rel (%p183) target = $region40
        $region39: #{tpu_custom_call.1} parent=35 // pred_region
          %186 = dma.done [#allocation3], 1024
        $region40: #{tpu_custom_call.1} parent=35 // pred_fallthru
          _
        %s187 = smul.u32 2, %s19
        %p188 = scmp.lt.s32.totalorder %s187, 3
        %s189 = scalar_select %p188, %s187, 3
        %s190 = smul.addr %s189, 4
        %s191 = scalar_lea.vmem %s0, %s190
        %p192 = pneg %p40
        %p193 = pneg %p37
        %p194 = pneg %p61
        %p195 = pneg %p58
        %p196 = pneg %p82
        %p197 = pneg %p79
        %p198 = pneg %p103
        %p199 = pneg %p100
        %p200 = pneg %p129
        %p201 = pneg %p126
        %s202 = sand.u32 %s116, 1
        %s203 = scalar_lea.sflag [#allocation4], %s202
        %s204 = sand.u32 %s116, 1
        %s205 = smul.addr %s204, 8
        %s206 = scalar_lea.vmem [#allocation5], %s205
        %s207 = smul.u32 2, %s19
        %p208 = scmp.lt.s32.totalorder %s207, 3
        %s209 = scalar_select %p208, %s207, 3
        %s210 = smul.addr %s209, 4
        %s211 = scalar_lea.vmem %s0, %s210
        %s212 = smul.u32 2, %s19
        %s213 = smul.u32 2, %s19
        %v214 = vld [vmem:[%s1] sm:$0xff]
        %v215 = vld [vmem:[%s1 + $0x8] sm:$0xf]
        %v216 = vld [vmem:[%s211] sm:$0xff]
        %v217 = vld [vmem:[%s2] sm:$0xff]
        %v218 = vld [vmem:[%s2 + $0x8] sm:$0xf]
        %220 = vset.pattern.permute.xlu0 0
        %221 = vperm.xlu0 %220, %v217
        %v222 = vpop.permute.xlu0 %221
        %225 = vset.pattern.permute.xlu0 0
        %226 = vperm.xlu0 %225, %v218
        %v227 = vpop.permute.xlu0 %226
        %v230 = vcombine.high %v216, %v216
        %vm231 = vcmask 31744
        %v233 = vsel %vm231, %v214, 0
        %v236 = vsel %vm231, %v215, 0
        %vm238 = vcmask 1043456
        %v239 = vsel %vm238, %v216, 0
        %v241 = vsel %vm238, %v230, 0
        %243 = vmatprep.subr.mxu0 %v241
        %244 = vmatpush1.msra.mxu0 %v239
        %245 = vmatprep.subr.mxu0 0.0
        %246 = vmatpush1.msra.mxu0 0.0
        %247 = vmatprep.subr.mxu0 0.0
        %248 = vmatpush1.msra.mxu0 0.0
        %249 = vmatprep.subr.mxu0 0.0
        %250 = vmatpush1.msra.mxu0 0.0
        %251 = vmatprep.subr.mxu0 0.0
        %252 = vmatpush1.msra.mxu0 0.0
        %253 = vmatprep.subr.mxu0 0.0
        %254 = vmatpush1.msra.mxu0 0.0
        %255 = vmatprep.subr.mxu0 0.0
        %256 = vmatpush1.msra.mxu0 0.0
        %257 = vmatprep.subr.mxu0 0.0
        %258 = vmatpush1.msra.mxu0 0.0
        %259 = vmatprep.subr.mxu0 0.0
        %260 = vmatpush1.msra.mxu0 0.0
        %261 = vmatprep.subr.mxu0 0.0
        %262 = vmatpush1.msra.mxu0 0.0
        %263 = vmatprep.subr.mxu0 0.0
        %264 = vmatpush1.msra.mxu0 0.0
        %265 = vmatprep.subr.mxu0 0.0
        %266 = vmatpush1.msra.mxu0 0.0
        %267 = vmatprep.subr.mxu0 0.0
        %268 = vmatpush1.msra.mxu0 0.0
        %269 = vmatprep.subr.mxu0 0.0
        %270 = vmatpush1.msra.mxu0 0.0
        %271 = vmatprep.subr.mxu0 0.0
        %272 = vmatpush1.msra.mxu0 0.0
        %273 = vmatprep.subr.mxu0 0.0
        %274 = vmatpush1.msra.mxu0 0.0
        %275 = vmatprep.subr.mxu0 0.0
        %276 = vmatpush1.msra.mxu0 0.0
        %277 = vmatprep.subr.mxu0 0.0
        %278 = vmatpush1.msra.mxu0 0.0
        %279 = vmatprep.subr.mxu0 0.0
        %280 = vmatpush1.msra.mxu0 0.0
        %281 = vmatprep.subr.mxu0 0.0
        %282 = vmatpush1.msra.mxu0 0.0
        %283 = vmatprep.subr.mxu0 0.0
        %284 = vmatpush1.msra.mxu0 0.0
        %285 = vmatprep.subr.mxu0 0.0
        %286 = vmatpush1.msra.mxu0 0.0
        %287 = vmatprep.subr.mxu0 0.0
        %288 = vmatpush1.msra.mxu0 0.0
        %289 = vmatprep.subr.mxu0 0.0
        %290 = vmatpush1.msra.mxu0 0.0
        %291 = vmatprep.subr.mxu0 0.0
        %292 = vmatpush1.msra.mxu0 0.0
        %293 = vmatprep.subr.mxu0 0.0
        %294 = vmatpush1.msra.mxu0 0.0
        %295 = vmatprep.subr.mxu0 0.0
        %296 = vmatpush1.msra.mxu0 0.0
        %297 = vmatprep.subr.mxu0 0.0
        %298 = vmatpush1.msra.mxu0 0.0
        %299 = vmatprep.subr.mxu0 0.0
        %300 = vmatpush1.msra.mxu0 0.0
        %301 = vmatprep.subr.mxu0 0.0
        %302 = vmatpush1.msra.mxu0 0.0
        %303 = vmatprep.subr.mxu0 0.0
        %304 = vmatpush1.msra.mxu0 0.0
        %305 = vmatprep.subr.mxu0 0.0
        %306 = vmatpush1.msra.mxu0 0.0
        %307 = vmatprep.mubr.f32.mxu0 0.0
        %308 = vmatmul.mubr.f32.gmra.mrb[0].mxu0 %v233
        %v309 = vpop.f32.mrb[0].mxu0
        %v310 = vadd.f32 %v222, %v309
        %v311 = vpop.f32.mrb[0].mxu0
        %v312 = vadd.f32 %v222, %v311
        %313 = vmatprep.mubr.f32.mxu0 0.0
        %314 = vmatmul.mubr.f32.gmra.mrb[0].mxu0 %v236
        %v315 = vpop.f32.mrb[0].mxu0
        %v316 = vadd.f32 %v227, %v315
        %v317 = vpop.f32.mrb[0].mxu0
        %v318 = vadd.f32 %v227, %v317
        %319 = vdwg.mxu0
        %322 = vrot.lane.b32.xlu0 %v310, 112
        %v323 = vpop.permute.xlu0 %322
        %324 = vrot.lane.b32.xlu0 %v316, 112
        %v325 = vpop.permute.xlu0 %324
        %328 = vrot.lane.b32.xlu0 %v310, 96
        %v329 = vpop.permute.xlu0 %328
        %330 = vrot.lane.b32.xlu0 %v316, 96
        %v331 = vpop.permute.xlu0 %330
        %334 = vrot.lane.b32.xlu0 %v310, 80
        %v335 = vpop.permute.xlu0 %334
        %336 = vrot.lane.b32.xlu0 %v316, 80
        %v337 = vpop.permute.xlu0 %336
        %340 = vrot.lane.b32.xlu0 %v310, 64
        %v341 = vpop.permute.xlu0 %340
        %342 = vrot.lane.b32.xlu0 %v316, 64
        %v343 = vpop.permute.xlu0 %342
        %346 = vrot.lane.b32.xlu0 %v310, 48
        %v347 = vpop.permute.xlu0 %346
        %348 = vrot.lane.b32.xlu0 %v316, 48
        %v349 = vpop.permute.xlu0 %348
        %352 = vrot.lane.b32.xlu0 %v310, 32
        %v353 = vpop.permute.xlu0 %352
        %354 = vrot.lane.b32.xlu0 %v316, 32
        %v355 = vpop.permute.xlu0 %354
        %358 = vrot.lane.b32.xlu0 %v310, 16
        %v359 = vpop.permute.xlu0 %358
        %360 = vrot.lane.b32.xlu0 %v316, 16
        %v361 = vpop.permute.xlu0 %360
        %366 = vrot.lane.b32.xlu0 %v312, 112
        %v367 = vpop.permute.xlu0 %366
        %368 = vrot.lane.b32.xlu0 %v318, 112
        %v369 = vpop.permute.xlu0 %368
        %372 = vrot.lane.b32.xlu0 %v312, 96
        %v373 = vpop.permute.xlu0 %372
        %374 = vrot.lane.b32.xlu0 %v318, 96
        %v375 = vpop.permute.xlu0 %374
        %378 = vrot.lane.b32.xlu0 %v312, 80
        %v379 = vpop.permute.xlu0 %378
        %380 = vrot.lane.b32.xlu0 %v318, 80
        %v381 = vpop.permute.xlu0 %380
        %384 = vrot.lane.b32.xlu0 %v312, 64
        %v385 = vpop.permute.xlu0 %384
        %386 = vrot.lane.b32.xlu0 %v318, 64
        %v387 = vpop.permute.xlu0 %386
        %390 = vrot.lane.b32.xlu0 %v312, 48
        %v391 = vpop.permute.xlu0 %390
        %392 = vrot.lane.b32.xlu0 %v318, 48
        %v393 = vpop.permute.xlu0 %392
        %396 = vrot.lane.b32.xlu0 %v312, 32
        %v397 = vpop.permute.xlu0 %396
        %398 = vrot.lane.b32.xlu0 %v318, 32
        %v399 = vpop.permute.xlu0 %398
        %402 = vrot.lane.b32.xlu0 %v312, 16
        %v403 = vpop.permute.xlu0 %402
        %404 = vrot.lane.b32.xlu0 %v318, 16
        %v405 = vpop.permute.xlu0 %404
        %v408 = vcombine.low %v310, %v329
        %v409 = vcombine.high %v310, %v329
        %v411 = vunpack.c.l.s4 1983009808
        %v412 = vunpack.c.0.s8 %v411
        %v413 = vlaneseq
        %v414 = vshrl.u32 %v413, 7
        %v415 = vsub.s32 %v412, %v414
        %v416 = vrot.slane %v408, %v415
        %v418 = vunpack.c.l.s4 1983009808
        %v419 = vunpack.c.0.s8 %v418
        %v420 = vlaneseq
        %v421 = vshrl.u32 %v420, 7
        %v422 = vsub.s32 %v419, %v421
        %v423 = vrot.slane %v409, %v422
        %v424 = vcombine.low %v323, %v335
        %v425 = vcombine.high %v323, %v335
        %v427 = vunpack.c.l.s4 1983009808
        %v428 = vunpack.c.0.s8 %v427
        %v429 = vlaneseq
        %v430 = vshrl.u32 %v429, 7
        %v431 = vsub.s32 %v428, %v430
        %v432 = vrot.slane %v424, %v431
        %v434 = vunpack.c.l.s4 1983009808
        %v435 = vunpack.c.0.s8 %v434
        %v436 = vlaneseq
        %v437 = vshrl.u32 %v436, 7
        %v438 = vsub.s32 %v435, %v437
        %v439 = vrot.slane %v425, %v438
        %v440 = vcombine.low %v341, %v353
        %v441 = vcombine.high %v341, %v353
        %v443 = vunpack.c.l.s4 1983009808
        %v444 = vunpack.c.0.s8 %v443
        %v445 = vlaneseq
        %v446 = vshrl.u32 %v445, 7
        %v447 = vsub.s32 %v444, %v446
        %v448 = vrot.slane %v440, %v447
        %v450 = vunpack.c.l.s4 1983009808
        %v451 = vunpack.c.0.s8 %v450
        %v452 = vlaneseq
        %v453 = vshrl.u32 %v452, 7
        %v454 = vsub.s32 %v451, %v453
        %v455 = vrot.slane %v441, %v454
        %v456 = vcombine.low %v347, %v359
        %v457 = vcombine.high %v347, %v359
        %v459 = vunpack.c.l.s4 1983009808
        %v460 = vunpack.c.0.s8 %v459
        %v461 = vlaneseq
        %v462 = vshrl.u32 %v461, 7
        %v463 = vsub.s32 %v460, %v462
        %v464 = vrot.slane %v456, %v463
        %v466 = vunpack.c.l.s4 1983009808
        %v467 = vunpack.c.0.s8 %v466
        %v468 = vlaneseq
        %v469 = vshrl.u32 %v468, 7
        %v470 = vsub.s32 %v467, %v469
        %v471 = vrot.slane %v457, %v470
        %v472 = vcombine.low %v416, %v432
        %v473 = vcombine.high %v416, %v432
        %v475 = vunpack.c.l.s4 1934713408
        %v476 = vunpack.c.0.s8 %v475
        %v477 = vlaneseq
        %v478 = vshrl.u32 %v477, 7
        %v479 = vsub.s32 %v476, %v478
        %v480 = vrot.slane %v472, %v479
        %v482 = vunpack.c.l.s4 1934713408
        %v483 = vunpack.c.0.s8 %v482
        %v484 = vlaneseq
        %v485 = vshrl.u32 %v484, 7
        %v486 = vsub.s32 %v483, %v485
        %v487 = vrot.slane %v473, %v486
        %v488 = vcombine.low %v423, %v439
        %v489 = vcombine.high %v423, %v439
        %v491 = vunpack.c.l.s4 1934713408
        %v492 = vunpack.c.0.s8 %v491
        %v493 = vlaneseq
        %v494 = vshrl.u32 %v493, 7
        %v495 = vsub.s32 %v492, %v494
        %v496 = vrot.slane %v488, %v495
        %v498 = vunpack.c.l.s4 1934713408
        %v499 = vunpack.c.0.s8 %v498
        %v500 = vlaneseq
        %v501 = vshrl.u32 %v500, 7
        %v502 = vsub.s32 %v499, %v501
        %v503 = vrot.slane %v489, %v502
        %v504 = vcombine.low %v448, %v464
        %v505 = vcombine.high %v448, %v464
        %v507 = vunpack.c.l.s4 1934713408
        %v508 = vunpack.c.0.s8 %v507
        %v509 = vlaneseq
        %v510 = vshrl.u32 %v509, 7
        %v511 = vsub.s32 %v508, %v510
        %v512 = vrot.slane %v504, %v511
        %v514 = vunpack.c.l.s4 1934713408
        %v515 = vunpack.c.0.s8 %v514
        %v516 = vlaneseq
        %v517 = vshrl.u32 %v516, 7
        %v518 = vsub.s32 %v515, %v517
        %v519 = vrot.slane %v505, %v518
        %v520 = vcombine.low %v455, %v471
        %v521 = vcombine.high %v455, %v471
        %v523 = vunpack.c.l.s4 1934713408
        %v524 = vunpack.c.0.s8 %v523
        %v525 = vlaneseq
        %v526 = vshrl.u32 %v525, 7
        %v527 = vsub.s32 %v524, %v526
        %v528 = vrot.slane %v520, %v527
        %v530 = vunpack.c.l.s4 1934713408
        %v531 = vunpack.c.0.s8 %v530
        %v532 = vlaneseq
        %v533 = vshrl.u32 %v532, 7
        %v534 = vsub.s32 %v531, %v533
        %v535 = vrot.slane %v521, %v534
        %v536 = vcombine.low %v480, %v512
        %v537 = vcombine.high %v480, %v512
        %v538 = vcombine.low %v487, %v519
        %v539 = vcombine.high %v487, %v519
        %v540 = vcombine.low %v496, %v528
        %v541 = vcombine.high %v496, %v528
        %v542 = vcombine.low %v503, %v535
        %v543 = vcombine.high %v503, %v535
        %v544 = vcombine.low %v312, %v373
        %v545 = vcombine.high %v312, %v373
        %v547 = vunpack.c.l.s4 1983009808
        %v548 = vunpack.c.0.s8 %v547
        %v549 = vlaneseq
        %v550 = vshrl.u32 %v549, 7
        %v551 = vsub.s32 %v548, %v550
        %v552 = vrot.slane %v544, %v551
        %v554 = vunpack.c.l.s4 1983009808
        %v555 = vunpack.c.0.s8 %v554
        %v556 = vlaneseq
        %v557 = vshrl.u32 %v556, 7
        %v558 = vsub.s32 %v555, %v557
        %v559 = vrot.slane %v545, %v558
        %v560 = vcombine.low %v367, %v379
        %v561 = vcombine.high %v367, %v379
        %v563 = vunpack.c.l.s4 1983009808
        %v564 = vunpack.c.0.s8 %v563
        %v565 = vlaneseq
        %v566 = vshrl.u32 %v565, 7
        %v567 = vsub.s32 %v564, %v566
        %v568 = vrot.slane %v560, %v567
        %v570 = vunpack.c.l.s4 1983009808
        %v571 = vunpack.c.0.s8 %v570
        %v572 = vlaneseq
        %v573 = vshrl.u32 %v572, 7
        %v574 = vsub.s32 %v571, %v573
        %v575 = vrot.slane %v561, %v574
        %v576 = vcombine.low %v385, %v397
        %v577 = vcombine.high %v385, %v397
        %v579 = vunpack.c.l.s4 1983009808
        %v580 = vunpack.c.0.s8 %v579
        %v581 = vlaneseq
        %v582 = vshrl.u32 %v581, 7
        %v583 = vsub.s32 %v580, %v582
        %v584 = vrot.slane %v576, %v583
        %v586 = vunpack.c.l.s4 1983009808
        %v587 = vunpack.c.0.s8 %v586
        %v588 = vlaneseq
        %v589 = vshrl.u32 %v588, 7
        %v590 = vsub.s32 %v587, %v589
        %v591 = vrot.slane %v577, %v590
        %v592 = vcombine.low %v391, %v403
        %v593 = vcombine.high %v391, %v403
        %v595 = vunpack.c.l.s4 1983009808
        %v596 = vunpack.c.0.s8 %v595
        %v597 = vlaneseq
        %v598 = vshrl.u32 %v597, 7
        %v599 = vsub.s32 %v596, %v598
        %v600 = vrot.slane %v592, %v599
        %v602 = vunpack.c.l.s4 1983009808
        %v603 = vunpack.c.0.s8 %v602
        %v604 = vlaneseq
        %v605 = vshrl.u32 %v604, 7
        %v606 = vsub.s32 %v603, %v605
        %v607 = vrot.slane %v593, %v606
        %v608 = vcombine.low %v552, %v568
        %v609 = vcombine.high %v552, %v568
        %v611 = vunpack.c.l.s4 1934713408
        %v612 = vunpack.c.0.s8 %v611
        %v613 = vlaneseq
        %v614 = vshrl.u32 %v613, 7
        %v615 = vsub.s32 %v612, %v614
        %v616 = vrot.slane %v608, %v615
        %v618 = vunpack.c.l.s4 1934713408
        %v619 = vunpack.c.0.s8 %v618
        %v620 = vlaneseq
        %v621 = vshrl.u32 %v620, 7
        %v622 = vsub.s32 %v619, %v621
        %v623 = vrot.slane %v609, %v622
        %v624 = vcombine.low %v559, %v575
        %v625 = vcombine.high %v559, %v575
        %v627 = vunpack.c.l.s4 1934713408
        %v628 = vunpack.c.0.s8 %v627
        %v629 = vlaneseq
        %v630 = vshrl.u32 %v629, 7
        %v631 = vsub.s32 %v628, %v630
        %v632 = vrot.slane %v624, %v631
        %v634 = vunpack.c.l.s4 1934713408
        %v635 = vunpack.c.0.s8 %v634
        %v636 = vlaneseq
        %v637 = vshrl.u32 %v636, 7
        %v638 = vsub.s32 %v635, %v637
        %v639 = vrot.slane %v625, %v638
        %v640 = vcombine.low %v584, %v600
        %v641 = vcombine.high %v584, %v600
        %v643 = vunpack.c.l.s4 1934713408
        %v644 = vunpack.c.0.s8 %v643
        %v645 = vlaneseq
        %v646 = vshrl.u32 %v645, 7
        %v647 = vsub.s32 %v644, %v646
        %v648 = vrot.slane %v640, %v647
        %v650 = vunpack.c.l.s4 1934713408
        %v651 = vunpack.c.0.s8 %v650
        %v652 = vlaneseq
        %v653 = vshrl.u32 %v652, 7
        %v654 = vsub.s32 %v651, %v653
        %v655 = vrot.slane %v641, %v654
        %v656 = vcombine.low %v591, %v607
        %v657 = vcombine.high %v591, %v607
        %v659 = vunpack.c.l.s4 1934713408
        %v660 = vunpack.c.0.s8 %v659
        %v661 = vlaneseq
        %v662 = vshrl.u32 %v661, 7
        %v663 = vsub.s32 %v660, %v662
        %v664 = vrot.slane %v656, %v663
        %v666 = vunpack.c.l.s4 1934713408
        %v667 = vunpack.c.0.s8 %v666
        %v668 = vlaneseq
        %v669 = vshrl.u32 %v668, 7
        %v670 = vsub.s32 %v667, %v669
        %v671 = vrot.slane %v657, %v670
        %v672 = vcombine.low %v616, %v648
        %v673 = vcombine.high %v616, %v648
        %v674 = vcombine.low %v623, %v655
        %v675 = vcombine.high %v623, %v655
        %v676 = vcombine.low %v632, %v664
        %v677 = vcombine.high %v632, %v664
        %v678 = vcombine.low %v639, %v671
        %v679 = vcombine.high %v639, %v671
        %v680 = vcombine.low %v316, %v331
        %v682 = vunpack.c.l.s4 1983009808
        %v683 = vunpack.c.0.s8 %v682
        %v684 = vlaneseq
        %v685 = vshrl.u32 %v684, 7
        %v686 = vsub.s32 %v683, %v685
        %v687 = vrot.slane %v680, %v686
        %v688 = vcombine.low %v325, %v337
        %v690 = vunpack.c.l.s4 1983009808
        %v691 = vunpack.c.0.s8 %v690
        %v692 = vlaneseq
        %v693 = vshrl.u32 %v692, 7
        %v694 = vsub.s32 %v691, %v693
        %v695 = vrot.slane %v688, %v694
        %v696 = vcombine.low %v343, %v355
        %v698 = vunpack.c.l.s4 1983009808
        %v699 = vunpack.c.0.s8 %v698
        %v700 = vlaneseq
        %v701 = vshrl.u32 %v700, 7
        %v702 = vsub.s32 %v699, %v701
        %v703 = vrot.slane %v696, %v702
        %v704 = vcombine.low %v349, %v361
        %v706 = vunpack.c.l.s4 1983009808
        %v707 = vunpack.c.0.s8 %v706
        %v708 = vlaneseq
        %v709 = vshrl.u32 %v708, 7
        %v710 = vsub.s32 %v707, %v709
        %v711 = vrot.slane %v704, %v710
        %v712 = vcombine.low %v687, %v695
        %v713 = vcombine.high %v687, %v695
        %v715 = vunpack.c.l.s4 1934713408
        %v716 = vunpack.c.0.s8 %v715
        %v717 = vlaneseq
        %v718 = vshrl.u32 %v717, 7
        %v719 = vsub.s32 %v716, %v718
        %v720 = vrot.slane %v712, %v719
        %v722 = vunpack.c.l.s4 1934713408
        %v723 = vunpack.c.0.s8 %v722
        %v724 = vlaneseq
        %v725 = vshrl.u32 %v724, 7
        %v726 = vsub.s32 %v723, %v725
        %v727 = vrot.slane %v713, %v726
        %v728 = vcombine.low %v703, %v711
        %v729 = vcombine.high %v703, %v711
        %v731 = vunpack.c.l.s4 1934713408
        %v732 = vunpack.c.0.s8 %v731
        %v733 = vlaneseq
        %v734 = vshrl.u32 %v733, 7
        %v735 = vsub.s32 %v732, %v734
        %v736 = vrot.slane %v728, %v735
        %v738 = vunpack.c.l.s4 1934713408
        %v739 = vunpack.c.0.s8 %v738
        %v740 = vlaneseq
        %v741 = vshrl.u32 %v740, 7
        %v742 = vsub.s32 %v739, %v741
        %v743 = vrot.slane %v729, %v742
        %v744 = vcombine.low %v720, %v736
        %v745 = vcombine.high %v720, %v736
        %v746 = vcombine.low %v727, %v743
        %v747 = vcombine.high %v727, %v743
        %v748 = vcombine.low %v318, %v375
        %v750 = vunpack.c.l.s4 1983009808
        %v751 = vunpack.c.0.s8 %v750
        %v752 = vlaneseq
        %v753 = vshrl.u32 %v752, 7
        %v754 = vsub.s32 %v751, %v753
        %v755 = vrot.slane %v748, %v754
        %v756 = vcombine.low %v369, %v381
        %v758 = vunpack.c.l.s4 1983009808
        %v759 = vunpack.c.0.s8 %v758
        %v760 = vlaneseq
        %v761 = vshrl.u32 %v760, 7
        %v762 = vsub.s32 %v759, %v761
        %v763 = vrot.slane %v756, %v762
        %v764 = vcombine.low %v387, %v399
        %v766 = vunpack.c.l.s4 1983009808
        %v767 = vunpack.c.0.s8 %v766
        %v768 = vlaneseq
        %v769 = vshrl.u32 %v768, 7
        %v770 = vsub.s32 %v767, %v769
        %v771 = vrot.slane %v764, %v770
        %v772 = vcombine.low %v393, %v405
        %v774 = vunpack.c.l.s4 1983009808
        %v775 = vunpack.c.0.s8 %v774
        %v776 = vlaneseq
        %v777 = vshrl.u32 %v776, 7
        %v778 = vsub.s32 %v775, %v777
        %v779 = vrot.slane %v772, %v778
        %v780 = vcombine.low %v755, %v763
        %v781 = vcombine.high %v755, %v763
        %v783 = vunpack.c.l.s4 1934713408
        %v784 = vunpack.c.0.s8 %v783
        %v785 = vlaneseq
        %v786 = vshrl.u32 %v785, 7
        %v787 = vsub.s32 %v784, %v786
        %v788 = vrot.slane %v780, %v787
        %v790 = vunpack.c.l.s4 1934713408
        %v791 = vunpack.c.0.s8 %v790
        %v792 = vlaneseq
        %v793 = vshrl.u32 %v792, 7
        %v794 = vsub.s32 %v791, %v793
        %v795 = vrot.slane %v781, %v794
        %v796 = vcombine.low %v771, %v779
        %v797 = vcombine.high %v771, %v779
        %v799 = vunpack.c.l.s4 1934713408
        %v800 = vunpack.c.0.s8 %v799
        %v801 = vlaneseq
        %v802 = vshrl.u32 %v801, 7
        %v803 = vsub.s32 %v800, %v802
        %v804 = vrot.slane %v796, %v803
        %v806 = vunpack.c.l.s4 1934713408
        %v807 = vunpack.c.0.s8 %v806
        %v808 = vlaneseq
        %v809 = vshrl.u32 %v808, 7
        %v810 = vsub.s32 %v807, %v809
        %v811 = vrot.slane %v797, %v810
        %v812 = vcombine.low %v788, %v804
        %v813 = vcombine.high %v788, %v804
        %v814 = vcombine.low %v795, %v811
        %v815 = vcombine.high %v795, %v811
        %v816 = vld [vmem:[#allocation2] sm:$0xff]
        %v817 = vld [vmem:[#allocation2 + $0x8] sm:$0xff]
        %v818 = vld [vmem:[#allocation2 + $0x10] sm:$0xff]
        %v819 = vld [vmem:[#allocation2 + $0x18] sm:$0xff]
        %v820 = vld [vmem:[#allocation2 + $0x20] sm:$0xff]
        %v821 = vld [vmem:[#allocation2 + $0x28] sm:$0xff]
        %v822 = vld [vmem:[#allocation2 + $0x30] sm:$0xff]
        %v823 = vld [vmem:[#allocation2 + $0x38] sm:$0xff]
        %v824 = vadd.f32 %v540, %v816
        %v825 = vadd.f32 %v676, %v817
        %v826 = vadd.f32 %v541, %v818
        %v827 = vadd.f32 %v677, %v819
        %v828 = vadd.f32 %v542, %v820
        %v829 = vadd.f32 %v678, %v821
        %v830 = vadd.f32 %v543, %v822
        %v831 = vadd.f32 %v679, %v823
        %vm832 = vcmask 130048
        %v834 = vsel %vm832, %v536, 0
        %v837 = vsel %vm832, %v672, 0
        %v840 = vsel %vm832, %v824, 0
        %v843 = vsel %vm832, %v825, 0
        %845 = vmatprep.subr.mxu0 0.0
        %846 = vmatpush1.xpose.msra.mxu0 %v840
        %847 = vmatprep.subr.mxu0 0.0
        %848 = vmatpush1.xpose.msra.mxu0 %v843
        %849 = vmatprep.subr.mxu0 0.0
        %850 = vmatpush1.xpose.msra.mxu0 0.0
        %851 = vmatprep.subr.mxu0 0.0
        %852 = vmatpush1.xpose.msra.mxu0 0.0
        %853 = vmatprep.subr.mxu0 0.0
        %854 = vmatpush1.xpose.msra.mxu0 0.0
        %855 = vmatprep.subr.mxu0 0.0
        %856 = vmatpush1.xpose.msra.mxu0 0.0
        %857 = vmatprep.subr.mxu0 0.0
        %858 = vmatpush1.xpose.msra.mxu0 0.0
        %859 = vmatprep.subr.mxu0 0.0
        %860 = vmatpush1.xpose.msra.mxu0 0.0
        %861 = vmatprep.subr.mxu0 0.0
        %862 = vmatpush1.xpose.msra.mxu0 0.0
        %863 = vmatprep.subr.mxu0 0.0
        %864 = vmatpush1.xpose.msra.mxu0 0.0
        %865 = vmatprep.subr.mxu0 0.0
        %866 = vmatpush1.xpose.msra.mxu0 0.0
        %867 = vmatprep.subr.mxu0 0.0
        %868 = vmatpush1.xpose.msra.mxu0 0.0
        %869 = vmatprep.subr.mxu0 0.0
        %870 = vmatpush1.xpose.msra.mxu0 0.0
        %871 = vmatprep.subr.mxu0 0.0
        %872 = vmatpush1.xpose.msra.mxu0 0.0
        %873 = vmatprep.subr.mxu0 0.0
        %874 = vmatpush1.xpose.msra.mxu0 0.0
        %875 = vmatprep.subr.mxu0 0.0
        %876 = vmatpush1.xpose.msra.mxu0 0.0
        %877 = vmatprep.subr.mxu0 0.0
        %878 = vmatpush1.xpose.msra.mxu0 0.0
        %879 = vmatprep.subr.mxu0 0.0
        %880 = vmatpush1.xpose.msra.mxu0 0.0
        %881 = vmatprep.subr.mxu0 0.0
        %882 = vmatpush1.xpose.msra.mxu0 0.0
        %883 = vmatprep.subr.mxu0 0.0
        %884 = vmatpush1.xpose.msra.mxu0 0.0
        %885 = vmatprep.subr.mxu0 0.0
        %886 = vmatpush1.xpose.msra.mxu0 0.0
        %887 = vmatprep.subr.mxu0 0.0
        %888 = vmatpush1.xpose.msra.mxu0 0.0
        %889 = vmatprep.subr.mxu0 0.0
        %890 = vmatpush1.xpose.msra.mxu0 0.0
        %891 = vmatprep.subr.mxu0 0.0
        %892 = vmatpush1.xpose.msra.mxu0 0.0
        %893 = vmatprep.subr.mxu0 0.0
        %894 = vmatpush1.xpose.msra.mxu0 0.0
        %895 = vmatprep.subr.mxu0 0.0
        %896 = vmatpush1.xpose.msra.mxu0 0.0
        %897 = vmatprep.subr.mxu0 0.0
        %898 = vmatpush1.xpose.msra.mxu0 0.0
        %899 = vmatprep.subr.mxu0 0.0
        %900 = vmatpush1.xpose.msra.mxu0 0.0
        %901 = vmatprep.subr.mxu0 0.0
        %902 = vmatpush1.xpose.msra.mxu0 0.0
        %903 = vmatprep.subr.mxu0 0.0
        %904 = vmatpush1.xpose.msra.mxu0 0.0
        %905 = vmatprep.subr.mxu0 0.0
        %906 = vmatpush1.xpose.msra.mxu0 0.0
        %907 = vmatprep.subr.mxu0 0.0
        %908 = vmatpush1.xpose.msra.mxu0 0.0
        %909 = vmatprep.mubr.f32.mxu0 0.0
        %910 = vmatmul.mubr.f32.gmra.mrb[0].mxu0 %v834
        %v911 = vpop.f32.mrb[0].mxu0
        %v912 = vadd.f32 0.0, %v911
        %v913 = vpop.f32.mrb[0].mxu0
        %914 = vmatprep.mubr.f32.mxu0 0.0
        %915 = vmatmul.mubr.f32.gmra.mrb[0].mxu0 %v837
        %v916 = vpop.f32.mrb[0].mxu0
        %v917 = vadd.f32 0.0, %v916
        %v918 = vpop.f32.mrb[0].mxu0
        %919 = vdwg.mxu0
        %v921 = vsel %vm832, %v537, 0
        %v924 = vsel %vm832, %v673, 0
        %v927 = vsel %vm832, %v826, 0
        %v930 = vsel %vm832, %v827, 0
        %932 = vmatprep.subr.mxu0 0.0
        %933 = vmatpush1.xpose.msra.mxu0 %v927
        %934 = vmatprep.subr.mxu0 0.0
        %935 = vmatpush1.xpose.msra.mxu0 %v930
        %936 = vmatprep.subr.mxu0 0.0
        %937 = vmatpush1.xpose.msra.mxu0 0.0
        %938 = vmatprep.subr.mxu0 0.0
        %939 = vmatpush1.xpose.msra.mxu0 0.0
        %940 = vmatprep.subr.mxu0 0.0
        %941 = vmatpush1.xpose.msra.mxu0 0.0
        %942 = vmatprep.subr.mxu0 0.0
        %943 = vmatpush1.xpose.msra.mxu0 0.0
        %944 = vmatprep.subr.mxu0 0.0
        %945 = vmatpush1.xpose.msra.mxu0 0.0
        %946 = vmatprep.subr.mxu0 0.0
        %947 = vmatpush1.xpose.msra.mxu0 0.0
        %948 = vmatprep.subr.mxu0 0.0
        %949 = vmatpush1.xpose.msra.mxu0 0.0
        %950 = vmatprep.subr.mxu0 0.0
        %951 = vmatpush1.xpose.msra.mxu0 0.0
        %952 = vmatprep.subr.mxu0 0.0
        %953 = vmatpush1.xpose.msra.mxu0 0.0
        %954 = vmatprep.subr.mxu0 0.0
        %955 = vmatpush1.xpose.msra.mxu0 0.0
        %956 = vmatprep.subr.mxu0 0.0
        %957 = vmatpush1.xpose.msra.mxu0 0.0
        %958 = vmatprep.subr.mxu0 0.0
        %959 = vmatpush1.xpose.msra.mxu0 0.0
        %960 = vmatprep.subr.mxu0 0.0
        %961 = vmatpush1.xpose.msra.mxu0 0.0
        %962 = vmatprep.subr.mxu0 0.0
        %963 = vmatpush1.xpose.msra.mxu0 0.0
        %964 = vmatprep.subr.mxu0 0.0
        %965 = vmatpush1.xpose.msra.mxu0 0.0
        %966 = vmatprep.subr.mxu0 0.0
        %967 = vmatpush1.xpose.msra.mxu0 0.0
        %968 = vmatprep.subr.mxu0 0.0
        %969 = vmatpush1.xpose.msra.mxu0 0.0
        %970 = vmatprep.subr.mxu0 0.0
        %971 = vmatpush1.xpose.msra.mxu0 0.0
        %972 = vmatprep.subr.mxu0 0.0
        %973 = vmatpush1.xpose.msra.mxu0 0.0
        %974 = vmatprep.subr.mxu0 0.0
        %975 = vmatpush1.xpose.msra.mxu0 0.0
        %976 = vmatprep.subr.mxu0 0.0
        %977 = vmatpush1.xpose.msra.mxu0 0.0
        %978 = vmatprep.subr.mxu0 0.0
        %979 = vmatpush1.xpose.msra.mxu0 0.0
        %980 = vmatprep.subr.mxu0 0.0
        %981 = vmatpush1.xpose.msra.mxu0 0.0
        %982 = vmatprep.subr.mxu0 0.0
        %983 = vmatpush1.xpose.msra.mxu0 0.0
        %984 = vmatprep.subr.mxu0 0.0
        %985 = vmatpush1.xpose.msra.mxu0 0.0
        %986 = vmatprep.subr.mxu0 0.0
        %987 = vmatpush1.xpose.msra.mxu0 0.0
        %988 = vmatprep.subr.mxu0 0.0
        %989 = vmatpush1.xpose.msra.mxu0 0.0
        %990 = vmatprep.subr.mxu0 0.0
        %991 = vmatpush1.xpose.msra.mxu0 0.0
        %992 = vmatprep.subr.mxu0 0.0
        %993 = vmatpush1.xpose.msra.mxu0 0.0
        %994 = vmatprep.subr.mxu0 0.0
        %995 = vmatpush1.xpose.msra.mxu0 0.0
        %996 = vmatprep.mubr.f32.mxu0 0.0
        %997 = vmatmul.mubr.f32.gmra.mrb[0].mxu0 %v921
        %v998 = vpop.f32.mrb[0].mxu0
        %v999 = vadd.f32 0.0, %v998
        %v1000 = vpop.f32.mrb[0].mxu0
        %1001 = vmatprep.mubr.f32.mxu0 0.0
        %1002 = vmatmul.mubr.f32.gmra.mrb[0].mxu0 %v924
        %v1003 = vpop.f32.mrb[0].mxu0
        %v1004 = vadd.f32 0.0, %v1003
        %v1005 = vpop.f32.mrb[0].mxu0
        %1006 = vdwg.mxu0
        %v1008 = vsel %vm832, %v538, 0
        %v1011 = vsel %vm832, %v674, 0
        %v1014 = vsel %vm832, %v828, 0
        %v1017 = vsel %vm832, %v829, 0
        %1019 = vmatprep.subr.mxu0 0.0
        %1020 = vmatpush1.xpose.msra.mxu0 %v1014
        %1021 = vmatprep.subr.mxu0 0.0
        %1022 = vmatpush1.xpose.msra.mxu0 %v1017
        %1023 = vmatprep.subr.mxu0 0.0
        %1024 = vmatpush1.xpose.msra.mxu0 0.0
        %1025 = vmatprep.subr.mxu0 0.0
        %1026 = vmatpush1.xpose.msra.mxu0 0.0
        %1027 = vmatprep.subr.mxu0 0.0
        %1028 = vmatpush1.xpose.msra.mxu0 0.0
        %1029 = vmatprep.subr.mxu0 0.0
        %1030 = vmatpush1.xpose.msra.mxu0 0.0
        %1031 = vmatprep.subr.mxu0 0.0
        %1032 = vmatpush1.xpose.msra.mxu0 0.0
        %1033 = vmatprep.subr.mxu0 0.0
        %1034 = vmatpush1.xpose.msra.mxu0 0.0
        %1035 = vmatprep.subr.mxu0 0.0
        %1036 = vmatpush1.xpose.msra.mxu0 0.0
        %1037 = vmatprep.subr.mxu0 0.0
        %1038 = vmatpush1.xpose.msra.mxu0 0.0
        %1039 = vmatprep.subr.mxu0 0.0
        %1040 = vmatpush1.xpose.msra.mxu0 0.0
        %1041 = vmatprep.subr.mxu0 0.0
        %1042 = vmatpush1.xpose.msra.mxu0 0.0
        %1043 = vmatprep.subr.mxu0 0.0
        %1044 = vmatpush1.xpose.msra.mxu0 0.0
        %1045 = vmatprep.subr.mxu0 0.0
        %1046 = vmatpush1.xpose.msra.mxu0 0.0
        %1047 = vmatprep.subr.mxu0 0.0
        %1048 = vmatpush1.xpose.msra.mxu0 0.0
        %1049 = vmatprep.subr.mxu0 0.0
        %1050 = vmatpush1.xpose.msra.mxu0 0.0
        %1051 = vmatprep.subr.mxu0 0.0
        %1052 = vmatpush1.xpose.msra.mxu0 0.0
        %1053 = vmatprep.subr.mxu0 0.0
        %1054 = vmatpush1.xpose.msra.mxu0 0.0
        %1055 = vmatprep.subr.mxu0 0.0
        %1056 = vmatpush1.xpose.msra.mxu0 0.0
        %1057 = vmatprep.subr.mxu0 0.0
        %1058 = vmatpush1.xpose.msra.mxu0 0.0
        %1059 = vmatprep.subr.mxu0 0.0
        %1060 = vmatpush1.xpose.msra.mxu0 0.0
        %1061 = vmatprep.subr.mxu0 0.0
        %1062 = vmatpush1.xpose.msra.mxu0 0.0
        %1063 = vmatprep.subr.mxu0 0.0
        %1064 = vmatpush1.xpose.msra.mxu0 0.0
        %1065 = vmatprep.subr.mxu0 0.0
        %1066 = vmatpush1.xpose.msra.mxu0 0.0
        %1067 = vmatprep.subr.mxu0 0.0
        %1068 = vmatpush1.xpose.msra.mxu0 0.0
        %1069 = vmatprep.subr.mxu0 0.0
        %1070 = vmatpush1.xpose.msra.mxu0 0.0
        %1071 = vmatprep.subr.mxu0 0.0
        %1072 = vmatpush1.xpose.msra.mxu0 0.0
        %1073 = vmatprep.subr.mxu0 0.0
        %1074 = vmatpush1.xpose.msra.mxu0 0.0
        %1075 = vmatprep.subr.mxu0 0.0
        %1076 = vmatpush1.xpose.msra.mxu0 0.0
        %1077 = vmatprep.subr.mxu0 0.0
        %1078 = vmatpush1.xpose.msra.mxu0 0.0
        %1079 = vmatprep.subr.mxu0 0.0
        %1080 = vmatpush1.xpose.msra.mxu0 0.0
        %1081 = vmatprep.subr.mxu0 0.0
        %1082 = vmatpush1.xpose.msra.mxu0 0.0
        %1083 = vmatprep.mubr.f32.mxu0 0.0
        %1084 = vmatmul.mubr.f32.gmra.mrb[0].mxu0 %v1008
        %v1085 = vpop.f32.mrb[0].mxu0
        %v1086 = vadd.f32 0.0, %v1085
        %v1087 = vpop.f32.mrb[0].mxu0
        %1088 = vmatprep.mubr.f32.mxu0 0.0
        %1089 = vmatmul.mubr.f32.gmra.mrb[0].mxu0 %v1011
        %v1090 = vpop.f32.mrb[0].mxu0
        %v1091 = vadd.f32 0.0, %v1090
        %v1092 = vpop.f32.mrb[0].mxu0
        %1093 = vdwg.mxu0
        %v1095 = vsel %vm832, %v539, 0
        %v1098 = vsel %vm832, %v675, 0
        %v1101 = vsel %vm832, %v830, 0
        %v1104 = vsel %vm832, %v831, 0
        %1106 = vmatprep.subr.mxu0 0.0
        %1107 = vmatpush1.xpose.msra.mxu0 %v1101
        %1108 = vmatprep.subr.mxu0 0.0
        %1109 = vmatpush1.xpose.msra.mxu0 %v1104
        %1110 = vmatprep.subr.mxu0 0.0
        %1111 = vmatpush1.xpose.msra.mxu0 0.0
        %1112 = vmatprep.subr.mxu0 0.0
        %1113 = vmatpush1.xpose.msra.mxu0 0.0
        %1114 = vmatprep.subr.mxu0 0.0
        %1115 = vmatpush1.xpose.msra.mxu0 0.0
        %1116 = vmatprep.subr.mxu0 0.0
        %1117 = vmatpush1.xpose.msra.mxu0 0.0
        %1118 = vmatprep.subr.mxu0 0.0
        %1119 = vmatpush1.xpose.msra.mxu0 0.0
        %1120 = vmatprep.subr.mxu0 0.0
        %1121 = vmatpush1.xpose.msra.mxu0 0.0
        %1122 = vmatprep.subr.mxu0 0.0
        %1123 = vmatpush1.xpose.msra.mxu0 0.0
        %1124 = vmatprep.subr.mxu0 0.0
        %1125 = vmatpush1.xpose.msra.mxu0 0.0
        %1126 = vmatprep.subr.mxu0 0.0
        %1127 = vmatpush1.xpose.msra.mxu0 0.0
        %1128 = vmatprep.subr.mxu0 0.0
        %1129 = vmatpush1.xpose.msra.mxu0 0.0
        %1130 = vmatprep.subr.mxu0 0.0
        %1131 = vmatpush1.xpose.msra.mxu0 0.0
        %1132 = vmatprep.subr.mxu0 0.0
        %1133 = vmatpush1.xpose.msra.mxu0 0.0
        %1134 = vmatprep.subr.mxu0 0.0
        %1135 = vmatpush1.xpose.msra.mxu0 0.0
        %1136 = vmatprep.subr.mxu0 0.0
        %1137 = vmatpush1.xpose.msra.mxu0 0.0
        %1138 = vmatprep.subr.mxu0 0.0
        %1139 = vmatpush1.xpose.msra.mxu0 0.0
        %1140 = vmatprep.subr.mxu0 0.0
        %1141 = vmatpush1.xpose.msra.mxu0 0.0
        %1142 = vmatprep.subr.mxu0 0.0
        %1143 = vmatpush1.xpose.msra.mxu0 0.0
        %1144 = vmatprep.subr.mxu0 0.0
        %1145 = vmatpush1.xpose.msra.mxu0 0.0
        %1146 = vmatprep.subr.mxu0 0.0
        %1147 = vmatpush1.xpose.msra.mxu0 0.0
        %1148 = vmatprep.subr.mxu0 0.0
        %1149 = vmatpush1.xpose.msra.mxu0 0.0
        %1150 = vmatprep.subr.mxu0 0.0
        %1151 = vmatpush1.xpose.msra.mxu0 0.0
        %1152 = vmatprep.subr.mxu0 0.0
        %1153 = vmatpush1.xpose.msra.mxu0 0.0
        %1154 = vmatprep.subr.mxu0 0.0
        %1155 = vmatpush1.xpose.msra.mxu0 0.0
        %1156 = vmatprep.subr.mxu0 0.0
        %1157 = vmatpush1.xpose.msra.mxu0 0.0
        %1158 = vmatprep.subr.mxu0 0.0
        %1159 = vmatpush1.xpose.msra.mxu0 0.0
        %1160 = vmatprep.subr.mxu0 0.0
        %1161 = vmatpush1.xpose.msra.mxu0 0.0
        %1162 = vmatprep.subr.mxu0 0.0
        %1163 = vmatpush1.xpose.msra.mxu0 0.0
        %1164 = vmatprep.subr.mxu0 0.0
        %1165 = vmatpush1.xpose.msra.mxu0 0.0
        %1166 = vmatprep.subr.mxu0 0.0
        %1167 = vmatpush1.xpose.msra.mxu0 0.0
        %1168 = vmatprep.subr.mxu0 0.0
        %1169 = vmatpush1.xpose.msra.mxu0 0.0
        %1170 = vmatprep.mubr.f32.mxu0 0.0
        %1171 = vmatmul.mubr.f32.gmra.mrb[0].mxu0 %v1095
        %v1172 = vpop.f32.mrb[0].mxu0
        %v1173 = vadd.f32 0.0, %v1172
        %v1174 = vpop.f32.mrb[0].mxu0
        %1175 = vmatprep.mubr.f32.mxu0 0.0
        %1176 = vmatmul.mubr.f32.gmra.mrb[0].mxu0 %v1098
        %v1177 = vpop.f32.mrb[0].mxu0
        %v1178 = vadd.f32 0.0, %v1177
        %v1179 = vpop.f32.mrb[0].mxu0
        %1180 = vdwg.mxu0
        %v1181 = vcombine.low %v912, %v1086
        %v1182 = vcombine.high %v912, %v1086
        %v1184 = vunpack.c.l.s4 1983009808
        %v1185 = vunpack.c.0.s8 %v1184
        %v1186 = vlaneseq
        %v1187 = vshrl.u32 %v1186, 7
        %v1188 = vsub.s32 %v1185, %v1187
        %v1189 = vrot.slane %v1181, %v1188
        %v1191 = vunpack.c.l.s4 1983009808
        %v1192 = vunpack.c.0.s8 %v1191
        %v1193 = vlaneseq
        %v1194 = vshrl.u32 %v1193, 7
        %v1195 = vsub.s32 %v1192, %v1194
        %v1196 = vrot.slane %v1182, %v1195
        %v1197 = vcombine.low %v999, %v1173
        %v1198 = vcombine.high %v999, %v1173
        %v1200 = vunpack.c.l.s4 1983009808
        %v1201 = vunpack.c.0.s8 %v1200
        %v1202 = vlaneseq
        %v1203 = vshrl.u32 %v1202, 7
        %v1204 = vsub.s32 %v1201, %v1203
        %v1205 = vrot.slane %v1197, %v1204
        %v1207 = vunpack.c.l.s4 1983009808
        %v1208 = vunpack.c.0.s8 %v1207
        %v1209 = vlaneseq
        %v1210 = vshrl.u32 %v1209, 7
        %v1211 = vsub.s32 %v1208, %v1210
        %v1212 = vrot.slane %v1198, %v1211
        %v1213 = vcombine.low %v1189, %v1205
        %v1214 = vcombine.high %v1189, %v1205
        %v1216 = vunpack.c.l.s4 1934713408
        %v1217 = vunpack.c.0.s8 %v1216
        %v1218 = vlaneseq
        %v1219 = vshrl.u32 %v1218, 7
        %v1220 = vsub.s32 %v1217, %v1219
        %v1221 = vrot.slane %v1213, %v1220
        %v1223 = vunpack.c.l.s4 1934713408
        %v1224 = vunpack.c.0.s8 %v1223
        %v1225 = vlaneseq
        %v1226 = vshrl.u32 %v1225, 7
        %v1227 = vsub.s32 %v1224, %v1226
        %v1228 = vrot.slane %v1214, %v1227
        %v1229 = vcombine.low %v1196, %v1212
        %v1230 = vcombine.high %v1196, %v1212
        %v1232 = vunpack.c.l.s4 1934713408
        %v1233 = vunpack.c.0.s8 %v1232
        %v1234 = vlaneseq
        %v1235 = vshrl.u32 %v1234, 7
        %v1236 = vsub.s32 %v1233, %v1235
        %v1237 = vrot.slane %v1229, %v1236
        %v1239 = vunpack.c.l.s4 1934713408
        %v1240 = vunpack.c.0.s8 %v1239
        %v1241 = vlaneseq
        %v1242 = vshrl.u32 %v1241, 7
        %v1243 = vsub.s32 %v1240, %v1242
        %v1244 = vrot.slane %v1230, %v1243
        %v1245 = vcombine.high %v1221, 0.0
        %v1246 = vcombine.high %v1228, 0.0
        %v1247 = vcombine.high %v1237, 0.0
        %v1248 = vcombine.high %v1244, 0.0
        %v1249 = vcombine.low %v917, %v1091
        %v1250 = vcombine.high %v917, %v1091
        %v1252 = vunpack.c.l.s4 1983009808
        %v1253 = vunpack.c.0.s8 %v1252
        %v1254 = vlaneseq
        %v1255 = vshrl.u32 %v1254, 7
        %v1256 = vsub.s32 %v1253, %v1255
        %v1257 = vrot.slane %v1249, %v1256
        %v1259 = vunpack.c.l.s4 1983009808
        %v1260 = vunpack.c.0.s8 %v1259
        %v1261 = vlaneseq
        %v1262 = vshrl.u32 %v1261, 7
        %v1263 = vsub.s32 %v1260, %v1262
        %v1264 = vrot.slane %v1250, %v1263
        %v1265 = vcombine.low %v1004, %v1178
        %v1266 = vcombine.high %v1004, %v1178
        %v1268 = vunpack.c.l.s4 1983009808
        %v1269 = vunpack.c.0.s8 %v1268
        %v1270 = vlaneseq
        %v1271 = vshrl.u32 %v1270, 7
        %v1272 = vsub.s32 %v1269, %v1271
        %v1273 = vrot.slane %v1265, %v1272
        %v1275 = vunpack.c.l.s4 1983009808
        %v1276 = vunpack.c.0.s8 %v1275
        %v1277 = vlaneseq
        %v1278 = vshrl.u32 %v1277, 7
        %v1279 = vsub.s32 %v1276, %v1278
        %v1280 = vrot.slane %v1266, %v1279
        %v1281 = vcombine.low %v1257, %v1273
        %v1282 = vcombine.high %v1257, %v1273
        %v1284 = vunpack.c.l.s4 1934713408
        %v1285 = vunpack.c.0.s8 %v1284
        %v1286 = vlaneseq
        %v1287 = vshrl.u32 %v1286, 7
        %v1288 = vsub.s32 %v1285, %v1287
        %v1289 = vrot.slane %v1281, %v1288
        %v1291 = vunpack.c.l.s4 1934713408
        %v1292 = vunpack.c.0.s8 %v1291
        %v1293 = vlaneseq
        %v1294 = vshrl.u32 %v1293, 7
        %v1295 = vsub.s32 %v1292, %v1294
        %v1296 = vrot.slane %v1282, %v1295
        %v1297 = vcombine.low %v1264, %v1280
        %v1298 = vcombine.high %v1264, %v1280
        %v1300 = vunpack.c.l.s4 1934713408
        %v1301 = vunpack.c.0.s8 %v1300
        %v1302 = vlaneseq
        %v1303 = vshrl.u32 %v1302, 7
        %v1304 = vsub.s32 %v1301, %v1303
        %v1305 = vrot.slane %v1297, %v1304
        %v1307 = vunpack.c.l.s4 1934713408
        %v1308 = vunpack.c.0.s8 %v1307
        %v1309 = vlaneseq
        %v1310 = vshrl.u32 %v1309, 7
        %v1311 = vsub.s32 %v1308, %v1310
        %v1312 = vrot.slane %v1298, %v1311
        %v1313 = vcombine.high %v1289, 0.0
        %v1314 = vcombine.high %v1296, 0.0
        %v1315 = vcombine.high %v1305, 0.0
        %v1316 = vcombine.high %v1312, 0.0
        %1318 = vrot.lane.b32.xlu0 %v1245, 16
        %v1319 = vpop.permute.xlu0 %1318
        %1322 = vrot.lane.b32.xlu0 %v1228, 32
        %v1323 = vpop.permute.xlu0 %1322
        %1326 = vrot.lane.b32.xlu0 %v1246, 48
        %v1327 = vpop.permute.xlu0 %1326
        %1330 = vrot.lane.b32.xlu0 %v1237, 64
        %v1331 = vpop.permute.xlu0 %1330
        %1334 = vrot.lane.b32.xlu0 %v1247, 80
        %v1335 = vpop.permute.xlu0 %1334
        %1338 = vrot.lane.b32.xlu0 %v1244, 96
        %v1339 = vpop.permute.xlu0 %1338
        %1342 = vrot.lane.b32.xlu0 %v1248, 112
        %v1343 = vpop.permute.xlu0 %1342
        %1346 = vrot.lane.b32.xlu0 %v1313, 16
        %v1347 = vpop.permute.xlu0 %1346
        %1350 = vrot.lane.b32.xlu0 %v1296, 32
        %v1351 = vpop.permute.xlu0 %1350
        %1354 = vrot.lane.b32.xlu0 %v1314, 48
        %v1355 = vpop.permute.xlu0 %1354
        %1358 = vrot.lane.b32.xlu0 %v1305, 64
        %v1359 = vpop.permute.xlu0 %1358
        %1362 = vrot.lane.b32.xlu0 %v1315, 80
        %v1363 = vpop.permute.xlu0 %1362
        %1366 = vrot.lane.b32.xlu0 %v1312, 96
        %v1367 = vpop.permute.xlu0 %1366
        %1370 = vrot.lane.b32.xlu0 %v1316, 112
        %v1371 = vpop.permute.xlu0 %1370
        %v1373 = vsel %vm832, %v1221, %v1319
        %vm1374 = vcmask 261120
        %v1375 = vsel %vm1374, %v1373, %v1323
        %vm1376 = vcmask 392192
        %v1377 = vsel %vm1376, %v1375, %v1327
        %vm1378 = vcmask 523264
        %v1379 = vsel %vm1378, %v1377, %v1331
        %vm1380 = vcmask 654336
        %v1381 = vsel %vm1380, %v1379, %v1335
        %vm1382 = vcmask 785408
        %v1383 = vsel %vm1382, %v1381, %v1339
        %vm1384 = vcmask 916480
        %v1385 = vsel %vm1384, %v1383, %v1343
        %v1386 = vsel %vm832, %v1289, %v1347
        %v1387 = vsel %vm1374, %v1386, %v1351
        %v1388 = vsel %vm1376, %v1387, %v1355
        %v1389 = vsel %vm1378, %v1388, %v1359
        %v1390 = vsel %vm1380, %v1389, %v1363
        %v1391 = vsel %vm1382, %v1390, %v1367
        %v1392 = vsel %vm1384, %v1391, %v1371
        %v1393 = vsel %vm238, %v1385, -inf
        %v1394 = vsel %vm238, %v1392, -inf
        %v1395 = vmax.f32 %v1393, %v1394
        %1396 = vmax.xlane.f32.xlu0 %v1395
        %v1397 = vpop.xlane.xlu0 %1396
        %v1398 = vsub.f32 %v1385, %v1397
        %v1399 = vsub.f32 %v1392, %v1397
        %v1400 = vmul.f32 %v1398, 1.442695
        %v1401 = vpow.pop %v1400
        %v1402 = vmul.f32 %v1399, 1.442695
        %v1403 = vpow.pop %v1402
        %v1404 = vsel %vm238, %v1401, 0.0
        %v1405 = vsel %vm238, %v1403, 0.0
        %v1406 = vadd.f32 %v1404, %v1405
        %1407 = vadd.xlane.f32.xlu0 %v1406
        %v1408 = vpop.xlane.xlu0 %1407
        %v1409 = vrcp.pop %v1408
        %v1410 = vmul.f32 %v1401, %v1409
        %v1411 = vmul.f32 %v1403, %v1409
        %v1412 = vcombine.low %v744, %v746
        %v1413 = vcombine.high %v744, %v746
        %v1415 = vunpack.c.l.s4 1983009808
        %v1416 = vunpack.c.0.s8 %v1415
        %v1417 = vlaneseq
        %v1418 = vshrl.u32 %v1417, 7
        %v1419 = vsub.s32 %v1416, %v1418
        %v1420 = vrot.slane %v1412, %v1419
        %v1422 = vunpack.c.l.s4 1983009808
        %v1423 = vunpack.c.0.s8 %v1422
        %v1424 = vlaneseq
        %v1425 = vshrl.u32 %v1424, 7
        %v1426 = vsub.s32 %v1423, %v1425
        %v1427 = vrot.slane %v1413, %v1426
        %v1428 = vcombine.low %v745, %v747
        %v1429 = vcombine.high %v745, %v747
        %v1431 = vunpack.c.l.s4 1983009808
        %v1432 = vunpack.c.0.s8 %v1431
        %v1433 = vlaneseq
        %v1434 = vshrl.u32 %v1433, 7
        %v1435 = vsub.s32 %v1432, %v1434
        %v1436 = vrot.slane %v1428, %v1435
        %v1438 = vunpack.c.l.s4 1983009808
        %v1439 = vunpack.c.0.s8 %v1438
        %v1440 = vlaneseq
        %v1441 = vshrl.u32 %v1440, 7
        %v1442 = vsub.s32 %v1439, %v1441
        %v1443 = vrot.slane %v1429, %v1442
        %v1444 = vcombine.low %v1420, %v1436
        %v1445 = vcombine.high %v1420, %v1436
        %v1447 = vunpack.c.l.s4 1934713408
        %v1448 = vunpack.c.0.s8 %v1447
        %v1449 = vlaneseq
        %v1450 = vshrl.u32 %v1449, 7
        %v1451 = vsub.s32 %v1448, %v1450
        %v1452 = vrot.slane %v1444, %v1451
        %v1454 = vunpack.c.l.s4 1934713408
        %v1455 = vunpack.c.0.s8 %v1454
        %v1456 = vlaneseq
        %v1457 = vshrl.u32 %v1456, 7
        %v1458 = vsub.s32 %v1455, %v1457
        %v1459 = vrot.slane %v1445, %v1458
        %v1460 = vcombine.low %v1427, %v1443
        %v1461 = vcombine.high %v1427, %v1443
        %v1463 = vunpack.c.l.s4 1934713408
        %v1464 = vunpack.c.0.s8 %v1463
        %v1465 = vlaneseq
        %v1466 = vshrl.u32 %v1465, 7
        %v1467 = vsub.s32 %v1464, %v1466
        %v1468 = vrot.slane %v1460, %v1467
        %v1470 = vunpack.c.l.s4 1934713408
        %v1471 = vunpack.c.0.s8 %v1470
        %v1472 = vlaneseq
        %v1473 = vshrl.u32 %v1472, 7
        %v1474 = vsub.s32 %v1471, %v1473
        %v1475 = vrot.slane %v1461, %v1474
        %v1476 = vcombine.high %v1452, 0.0
        %v1477 = vcombine.high %v1459, 0.0
        %v1478 = vcombine.high %v1468, 0.0
        %v1479 = vcombine.high %v1475, 0.0
        %v1480 = vcombine.low %v812, %v814
        %v1481 = vcombine.high %v812, %v814
        %v1483 = vunpack.c.l.s4 1983009808
        %v1484 = vunpack.c.0.s8 %v1483
        %v1485 = vlaneseq
        %v1486 = vshrl.u32 %v1485, 7
        %v1487 = vsub.s32 %v1484, %v1486
        %v1488 = vrot.slane %v1480, %v1487
        %v1490 = vunpack.c.l.s4 1983009808
        %v1491 = vunpack.c.0.s8 %v1490
        %v1492 = vlaneseq
        %v1493 = vshrl.u32 %v1492, 7
        %v1494 = vsub.s32 %v1491, %v1493
        %v1495 = vrot.slane %v1481, %v1494
        %v1496 = vcombine.low %v813, %v815
        %v1497 = vcombine.high %v813, %v815
        %v1499 = vunpack.c.l.s4 1983009808
        %v1500 = vunpack.c.0.s8 %v1499
        %v1501 = vlaneseq
        %v1502 = vshrl.u32 %v1501, 7
        %v1503 = vsub.s32 %v1500, %v1502
        %v1504 = vrot.slane %v1496, %v1503
        %v1506 = vunpack.c.l.s4 1983009808
        %v1507 = vunpack.c.0.s8 %v1506
        %v1508 = vlaneseq
        %v1509 = vshrl.u32 %v1508, 7
        %v1510 = vsub.s32 %v1507, %v1509
        %v1511 = vrot.slane %v1497, %v1510
        %v1512 = vcombine.low %v1488, %v1504
        %v1513 = vcombine.high %v1488, %v1504
        %v1515 = vunpack.c.l.s4 1934713408
        %v1516 = vunpack.c.0.s8 %v1515
        %v1517 = vlaneseq
        %v1518 = vshrl.u32 %v1517, 7
        %v1519 = vsub.s32 %v1516, %v1518
        %v1520 = vrot.slane %v1512, %v1519
        %v1522 = vunpack.c.l.s4 1934713408
        %v1523 = vunpack.c.0.s8 %v1522
        %v1524 = vlaneseq
        %v1525 = vshrl.u32 %v1524, 7
        %v1526 = vsub.s32 %v1523, %v1525
        %v1527 = vrot.slane %v1513, %v1526
        %v1528 = vcombine.low %v1495, %v1511
        %v1529 = vcombine.high %v1495, %v1511
        %v1531 = vunpack.c.l.s4 1934713408
        %v1532 = vunpack.c.0.s8 %v1531
        %v1533 = vlaneseq
        %v1534 = vshrl.u32 %v1533, 7
        %v1535 = vsub.s32 %v1532, %v1534
        %v1536 = vrot.slane %v1528, %v1535
        %v1538 = vunpack.c.l.s4 1934713408
        %v1539 = vunpack.c.0.s8 %v1538
        %v1540 = vlaneseq
        %v1541 = vshrl.u32 %v1540, 7
        %v1542 = vsub.s32 %v1539, %v1541
        %v1543 = vrot.slane %v1529, %v1542
        %v1544 = vcombine.high %v1520, 0.0
        %v1545 = vcombine.high %v1527, 0.0
        %v1546 = vcombine.high %v1536, 0.0
        %v1547 = vcombine.high %v1543, 0.0
        %1549 = vrot.lane.b32.xlu0 %v1476, 16
        %v1550 = vpop.permute.xlu0 %1549
        %1553 = vrot.lane.b32.xlu0 %v1459, 32
        %v1554 = vpop.permute.xlu0 %1553
        %1557 = vrot.lane.b32.xlu0 %v1477, 48
        %v1558 = vpop.permute.xlu0 %1557
        %1561 = vrot.lane.b32.xlu0 %v1468, 64
        %v1562 = vpop.permute.xlu0 %1561
        %1565 = vrot.lane.b32.xlu0 %v1478, 80
        %v1566 = vpop.permute.xlu0 %1565
        %1569 = vrot.lane.b32.xlu0 %v1475, 96
        %v1570 = vpop.permute.xlu0 %1569
        %1573 = vrot.lane.b32.xlu0 %v1479, 112
        %v1574 = vpop.permute.xlu0 %1573
        %1577 = vrot.lane.b32.xlu0 %v1544, 16
        %v1578 = vpop.permute.xlu0 %1577
        %1581 = vrot.lane.b32.xlu0 %v1527, 32
        %v1582 = vpop.permute.xlu0 %1581
        %1585 = vrot.lane.b32.xlu0 %v1545, 48
        %v1586 = vpop.permute.xlu0 %1585
        %1589 = vrot.lane.b32.xlu0 %v1536, 64
        %v1590 = vpop.permute.xlu0 %1589
        %1593 = vrot.lane.b32.xlu0 %v1546, 80
        %v1594 = vpop.permute.xlu0 %1593
        %1597 = vrot.lane.b32.xlu0 %v1543, 96
        %v1598 = vpop.permute.xlu0 %1597
        %1601 = vrot.lane.b32.xlu0 %v1547, 112
        %v1602 = vpop.permute.xlu0 %1601
        %v1604 = vsel %vm832, %v1452, %v1550
        %v1605 = vsel %vm1374, %v1604, %v1554
        %v1606 = vsel %vm1376, %v1605, %v1558
        %v1607 = vsel %vm1378, %v1606, %v1562
        %v1608 = vsel %vm1380, %v1607, %v1566
        %v1609 = vsel %vm1382, %v1608, %v1570
        %v1610 = vsel %vm1384, %v1609, %v1574
        %v1611 = vsel %vm832, %v1520, %v1578
        %v1612 = vsel %vm1374, %v1611, %v1582
        %v1613 = vsel %vm1376, %v1612, %v1586
        %v1614 = vsel %vm1378, %v1613, %v1590
        %v1615 = vsel %vm1380, %v1614, %v1594
        %v1616 = vsel %vm1382, %v1615, %v1598
        %v1617 = vsel %vm1384, %v1616, %v1602
        %v1618 = vmul.f32 %v1410, %v1610
        %v1619 = vmul.f32 %v1411, %v1617
        %v1622 = vcombine.low %v1618, %v1619
        %1624 = vst [vmem:[%s206] sm:$0xff] %v1622
        %s1625 = sand.u32 %s116, 1
        %s1626 = scalar_lea.sflag [#allocation4], %s1625
        %s1627 = sand.u32 %s116, 1
        %s1628 = smul.addr %s1627, 8
        %s1629 = scalar_lea.vmem [#allocation5], %s1628
        // Predicated region
        $region41: #{tpu_custom_call.1} parent=35 // pred_check
          %p1630 = pneg %p126
        $region42: #{tpu_custom_call.1} parent=35 // pred_check_branch
          %1632 = sbr.rel (%p1630) target = $region44
        $region43: #{tpu_custom_call.1} parent=35 // pred_region
          %s1633 = smul.u32 2, %s19
          %s1635 = ssub.s32 128, 128
          %1636 = vsyncadd %s1626, %s1635
          %s1637 = smul.addr %s1633, 64
          %s1638 = scalar_lea.hbm %s4, %s1637
          %s1640 = sshll.u32 %s1629, 4
          %s1641 = int_to_ptr.vmem [resolvable:$true] %s1640
          %1643 = dma.vmem_to_hbm [thread:$0]  %s1641, 128, %s1638, %s1626
        $region44: #{tpu_custom_call.1} parent=35 // pred_fallthru
          _
      $region36: #{tpu_custom_call.1} parent=5 // pred_fallthru
        _
      %p1644 = scmp.le.s32.totalorder 2, %s14
      // Predicated region
      $region45: #{tpu_custom_call.1} parent=5 // pred_check
        %p1645 = pneg %p1644
      $region46: #{tpu_custom_call.1} parent=5 // pred_check_branch
        %1647 = sbr.rel (%p1645) target = $region48
      $region47: #{tpu_custom_call.1} parent=5 // pred_region
        %s1648 = ssub.s32 %s14, 2
        // Predicated region
        $region49: #{tpu_custom_call.1} parent=47 // pred_check
          %p1649 = pneg %p132
        $region50: #{tpu_custom_call.1} parent=47 // pred_check_branch
          %1651 = sbr.rel (%p1649) target = $region52
        $region51: #{tpu_custom_call.1} parent=47 // pred_region
          %s1652 = sand.u32 %s117, 1
          %s1653 = scalar_lea.sflag [#allocation4], %s1652
          %s1654 = sand.u32 %s117, 1
          %s1655 = smul.addr %s1654, 8
          %s1656 = scalar_lea.vmem [#allocation5], %s1655
          %1657 = dma.done %s1653, 128
        $region52: #{tpu_custom_call.1} parent=47 // pred_fallthru
          _
      $region48: #{tpu_custom_call.1} parent=5 // pred_fallthru
        _
    $region6: #{tpu_custom_call.1} parent=1 // loop_footer
      %s18 = sadd.s32 1, %s14
    $region7: #{tpu_custom_call.1} parent=1 // loop_footer_branch
      %13 = sbr.rel target = $region3
    $region8: #{tpu_custom_call.1} parent=1 // loop_exit
      _
    %1658 = vsyncpa [#allocation3], 1
    %s1659 = scalar_lea.sflag [#allocation3], 1
    %1660 = vsyncpa %s1659, 1
    %1661 = vsyncpa [#allocation4], 1
    %s1662 = scalar_lea.sflag [#allocation4], 1
    %1663 = vsyncpa %s1662, 1

</llo_original>
